<compile_context>
chip_gen: v5e
topology: v5e:2x2
jax: 0.10.0
libtpu: 0.0.40
codegen_flags: <defaults>
</compile_context>

<pallas_src>
import jax
import jax.numpy as jnp
import numpy as np
from jax.experimental import pallas as pl
from jax.experimental.pallas import tpu as pltpu

EPS = 1e-5                             # nn.InstanceNorm1d default eps
_HIGHEST = jax.lax.Precision.HIGHEST   # fp32 MXU contract precision


def _round_up(n, m):
    return ((n + m - 1) // m) * m


def atom_emb_kernel(x_ref, ang_ref, g_ref, w1_ref, w2_ref, o_ref):
    # x_ref  : (TN, A*DIN) lane-dense block of flattened samples (f32)
    # ang_ref: (TN, DA)    decoy angle feats (pass-through, fused into output)
    # g_ref  : (A*DIN, A*DIN) block-diagonal grouped-mean operator (1/DIN per atom block)
    # w1_ref : (A*DIN, H)  linear1 weight^T tiled over atoms and pre-divided by A
    # w2_ref : (H, H)      linear2 weight^T
    # o_ref  : (TN, DA+H)  fused output [decoy_angle_feats | atom_emb]
    x = x_ref[...]
    g = g_ref[...]

    # InstanceNorm1d over the per-atom feature axis, computed on the lane-dense
    # (TN, A*DIN) layout: x @ G broadcasts each atom's mean (and mean of squares)
    # across that atom's DIN lanes; one-pass variance E[x^2]-E[x]^2.
    mu = jnp.dot(x, g, preferred_element_type=jnp.float32, precision=_HIGHEST)
    m2 = jnp.dot(x * x, g, preferred_element_type=jnp.float32, precision=_HIGHEST)
    var = m2 - mu * mu
    xn = (x - mu) * jax.lax.rsqrt(var + EPS)

    # Linear1 (bias-free) with the atom-mean folded into the weights:
    # xn_flat @ (tile(W1^T, A)/A) == mean_a(xn_a @ W1^T).
    h = jnp.dot(xn, w1_ref[...], preferred_element_type=jnp.float32,
                precision=_HIGHEST)
    h = jnp.maximum(h, 0.0)                                   # ReLU (after the mean)

    # InstanceNorm1d over H per sample (module's unsqueeze(1)/squeeze() path).
    mu2 = jnp.mean(h, axis=-1, keepdims=True)
    var2 = jnp.mean(h * h, axis=-1, keepdims=True) - mu2 * mu2
    hn = (h - mu2) * jax.lax.rsqrt(var2 + EPS)

    # Linear2 (bias-free) + ReLU.
    y = jnp.dot(hn, w2_ref[...], preferred_element_type=jnp.float32,
                precision=_HIGHEST)
    y = jnp.maximum(y, 0.0)

    # Fused concat [angle | emb] via two direct slice stores (no concat temp).
    da = ang_ref.shape[-1]
    o_ref[:, :da] = ang_ref[...].astype(o_ref.dtype)
    o_ref[:, da:] = y.astype(o_ref.dtype)


def atom_emb_layer(atom_emb, decoy_angle_feats, w1_t, w2_t, *, tn=2048):
    """AtomEmbLayer forward.

    atom_emb: (B, S, A, DIN); decoy_angle_feats: (B, S, DA)
    w1_t: (DIN, H) = linear1.weight.T ; w2_t: (H, H) = linear2.weight.T
    returns (B, S, DA + H) = concat([decoy_angle_feats, emb], axis=-1)
    """
    B, S, A, DIN = atom_emb.shape
    DA = decoy_angle_feats.shape[-1]
    H = w1_t.shape[1]
    N = B * S
    AD = A * DIN

    # Lane-dense inputs: (N, A*DIN) is a free contiguous reshape.
    x = atom_emb.reshape(N, AD).astype(jnp.float32)
    ang = decoy_angle_feats.reshape(N, DA).astype(jnp.float32)

    # Row-block size: 8-aligned, and aim for >= 2 grid steps when possible
    # (v7x shards a "parallel" grid axis across its 2 TensorCores).
    tn = _round_up(max(tn, 8), 8)
    tn_eff = min(tn, _round_up(max((N + 1) // 2, 8), 8))
    n_pad = _round_up(N, tn_eff)
    if n_pad != N:
        # Zero rows are numerically safe (var=0 -> rsqrt(eps)); sliced off below.
        x = jnp.pad(x, ((0, n_pad - N), (0, 0)))
        ang = jnp.pad(ang, ((0, n_pad - N), (0, 0)))

    # Grouped-mean operator: block-diagonal (AD, AD) with 1/DIN inside each atom's
    # block, so x @ G yields per-atom means broadcast across that atom's lanes.
    g = jnp.kron(jnp.eye(A, dtype=jnp.float32),
                 jnp.full((DIN, DIN), 1.0 / DIN, dtype=jnp.float32))
    # Fold the atom-mean into Linear1 (valid: bias-free, ReLU after the mean).
    w1_fold = jnp.tile(w1_t.astype(jnp.float32), (A, 1)) / A      # (AD, H)
    w2f = w2_t.astype(jnp.float32)

    out = pl.pallas_call(
        atom_emb_kernel,
        out_shape=jax.ShapeDtypeStruct((n_pad, DA + H), jnp.float32),
        grid_spec=pltpu.PrefetchScalarGridSpec(
            num_scalar_prefetch=0,
            grid=(n_pad // tn_eff,),
            in_specs=[
                pl.BlockSpec((tn_eff, AD), lambda i: (i, 0)),
                pl.BlockSpec((tn_eff, DA), lambda i: (i, 0)),
                # Constant index_map -> weights stay resident in VMEM across steps.
                pl.BlockSpec((AD, AD), lambda i: (0, 0)),
                pl.BlockSpec((AD, H), lambda i: (0, 0)),
                pl.BlockSpec((H, H), lambda i: (0, 0)),
            ],
            out_specs=pl.BlockSpec((tn_eff, DA + H), lambda i: (i, 0)),
        ),
        compiler_params=pltpu.CompilerParams(
            dimension_semantics=("parallel",),
            # Headroom for tn=2048 row blocks; well under physical VMEM on all gens
            # (v5e/v6e 128 MiB, v7x 64 MiB); raises v5e's 16 MiB default scoped limit.
            vmem_limit_bytes=32 * 1024 * 1024,
        ),
    )(x, ang, g, w1_fold, w2f)

    if n_pad != N:
        out = out[:N]
    return out.reshape(B, S, DA + H)


def _reference(atom_emb, decoy_angle_feats, w1_t, w2_t):
    """Pure-JAX reference following the original PyTorch op order exactly."""
    B, S, A, DIN = atom_emb.shape
    H = w1_t.shape[1]
    x = atom_emb.reshape(B * S, A, DIN).astype(jnp.float32)
    mu = x.mean(-1, keepdims=True)
    var = ((x - mu) ** 2).mean(-1, keepdims=True)
    xn = (x - mu) / jnp.sqrt(var + EPS)
    h = jnp.einsum("nad,dh->nah", xn, w1_t.astype(jnp.float32),
                   precision=_HIGHEST).mean(1)
    h = jnp.maximum(h, 0.0)
    mu2 = h.mean(-1, keepdims=True)
    var2 = ((h - mu2) ** 2).mean(-1, keepdims=True)
    hn = (h - mu2) / jnp.sqrt(var2 + EPS)
    y = jnp.maximum(jnp.dot(hn, w2_t.astype(jnp.float32), precision=_HIGHEST), 0.0)
    return jnp.concatenate([decoy_angle_feats.astype(jnp.float32),
                            y.reshape(B, S, H)], axis=-1)


if __name__ == "__main__":
    A = 16                        # atoms per residue
    DIN, H, DA = 7, 128, 32       # atom_emb_in=7 (module default), atom_emb_h, angle-feat dim

    key = jax.random.PRNGKey(0)
    k1, k2, k3, k4, k5, k6 = jax.random.split(key, 6)

    # nn.Linear weights are (out, in); the kernel takes them transposed to (in, out).
    w1 = jax.random.normal(k3, (H, DIN), dtype=jnp.float32) * (1.0 / np.sqrt(DIN))
    w2 = jax.random.normal(k4, (H, H), dtype=jnp.float32) * (1.0 / np.sqrt(H))
    w1_t, w2_t = w1.T, w2.T

    # Case 1: N = B*S even -> 2-step grid.
    B, S = 2, 8
    atom_emb = jax.random.normal(k1, (B, S, A, DIN), dtype=jnp.float32)
    decoy_angle_feats = jax.random.normal(k2, (B, S, DA), dtype=jnp.float32)
    out = jax.block_until_ready(atom_emb_layer(atom_emb, decoy_angle_feats, w1_t, w2_t))
    ref = _reference(atom_emb, decoy_angle_feats, w1_t, w2_t)
    np.testing.assert_allclose(np.asarray(out), np.asarray(ref), rtol=1e-4, atol=2e-4)
    assert out.shape == (B, S, DA + H)

    # Case 2: N = B*S not a multiple of 8 (exercises the padding path).
    B2, S2 = 3, 5
    atom_emb2 = jax.random.normal(k5, (B2, S2, A, DIN), dtype=jnp.float32)
    decoy_angle_feats2 = jax.random.normal(k6, (B2, S2, DA), dtype=jnp.float32)
    out2 = jax.block_until_ready(atom_emb_layer(atom_emb2, decoy_angle_feats2, w1_t, w2_t))
    ref2 = _reference(atom_emb2, decoy_angle_feats2, w1_t, w2_t)
    np.testing.assert_allclose(np.asarray(out2), np.asarray(ref2), rtol=1e-4, atol=2e-4)
    assert out2.shape == (B2, S2, DA + H)

    print("KERNEL_OK")
</pallas_src>

<mosaic_0001>
module attributes {stable_mosaic.version = 11 : i64} {
  func.func @atom_emb_kernel(%arg0: i32, %arg1: memref<8x112xf32, #tpu.memory_space<vmem>>, %arg2: memref<8x32xf32, #tpu.memory_space<vmem>>, %arg3: memref<112x112xf32, #tpu.memory_space<vmem>>, %arg4: memref<112x128xf32, #tpu.memory_space<vmem>>, %arg5: memref<128x128xf32, #tpu.memory_space<vmem>>, %arg6: memref<8x160xf32, #tpu.memory_space<vmem>>) attributes {dimension_semantics = [#tpu.dimension_semantics<parallel>], iteration_bounds = array<i64: 2>, scalar_prefetch = 0 : i64, scratch_operands = 0 : i64, tpu.core_type = #tpu.core_type<tc>, window_params = [{transform_indices = @transform_0, window_bounds = array<i64: 8, 112>}, {transform_indices = @transform_1, window_bounds = array<i64: 8, 32>}, {pipeline_mode = #tpu.pipeline_mode<synchronous>, transform_indices = @transform_2, window_bounds = array<i64: 112, 112>}, {pipeline_mode = #tpu.pipeline_mode<synchronous>, transform_indices = @transform_3, window_bounds = array<i64: 112, 128>}, {pipeline_mode = #tpu.pipeline_mode<synchronous>, transform_indices = @transform_4, window_bounds = array<i64: 128, 128>}, {transform_indices = @transform_5, window_bounds = array<i64: 8, 160>}]} {
    %c0 = arith.constant 0 : index
    %c0_0 = arith.constant 0 : index
    %0 = vector.load %arg1[%c0, %c0_0] : memref<8x112xf32, #tpu.memory_space<vmem>>, vector<8x112xf32>
    %c0_1 = arith.constant 0 : index
    %c0_2 = arith.constant 0 : index
    %1 = vector.load %arg3[%c0_1, %c0_2] : memref<112x112xf32, #tpu.memory_space<vmem>>, vector<112x112xf32>
    %cst = arith.constant dense<0.000000e+00> : vector<8x112xf32>
    %2 = tpu.matmul %0, %1, %cst {dimension_numbers = #tpu.dot_dimension_numbers<[1], [0], [0], [1], [0, 0, 1, 1], [], []>, precision = #tpu.contract_precision<fp32>} : vector<8x112xf32>, vector<112x112xf32>, vector<8x112xf32> -> vector<8x112xf32>
    %3 = arith.mulf %0, %0 : vector<8x112xf32>
    %cst_3 = arith.constant dense<0.000000e+00> : vector<8x112xf32>
    %4 = tpu.matmul %3, %1, %cst_3 {dimension_numbers = #tpu.dot_dimension_numbers<[1], [0], [0], [1], [0, 0, 1, 1], [], []>, precision = #tpu.contract_precision<fp32>} : vector<8x112xf32>, vector<112x112xf32>, vector<8x112xf32> -> vector<8x112xf32>
    %5 = arith.mulf %2, %2 : vector<8x112xf32>
    %6 = arith.subf %4, %5 : vector<8x112xf32>
    %7 = arith.subf %0, %2 : vector<8x112xf32>
    %cst_4 = arith.constant 9.99999974E-6 : f32
    %8 = vector.broadcast %cst_4 : f32 to vector<8x112xf32>
    %9 = arith.addf %6, %8 : vector<8x112xf32>
    %10 = math.rsqrt %9 : vector<8x112xf32>
    %11 = arith.mulf %7, %10 : vector<8x112xf32>
    %c0_5 = arith.constant 0 : index
    %c0_6 = arith.constant 0 : index
    %12 = vector.load %arg4[%c0_5, %c0_6] : memref<112x128xf32, #tpu.memory_space<vmem>>, vector<112x128xf32>
    %cst_7 = arith.constant dense<0.000000e+00> : vector<8x128xf32>
    %13 = tpu.matmul %11, %12, %cst_7 {dimension_numbers = #tpu.dot_dimension_numbers<[1], [0], [0], [1], [0, 0, 1, 1], [], []>, precision = #tpu.contract_precision<fp32>} : vector<8x112xf32>, vector<112x128xf32>, vector<8x128xf32> -> vector<8x128xf32>
    %cst_8 = arith.constant 0.000000e+00 : f32
    %14 = vector.broadcast %cst_8 : f32 to vector<8x128xf32>
    %15 = arith.maximumf %13, %14 : vector<8x128xf32>
    %cst_9 = arith.constant dense<0.000000e+00> : vector<8xf32>
    %16 = vector.multi_reduction <add>, %15, %cst_9 [1] : vector<8x128xf32> to vector<8xf32>
    %17 = vector.shape_cast %16 : vector<8xf32> to vector<8x1xf32>
    %cst_10 = arith.constant 1.280000e+02 : f32
    %18 = vector.broadcast %cst_10 : f32 to vector<8x1xf32>
    %19 = arith.divf %17, %18 : vector<8x1xf32>
    %20 = arith.mulf %15, %15 : vector<8x128xf32>
    %cst_11 = arith.constant dense<0.000000e+00> : vector<8xf32>
    %21 = vector.multi_reduction <add>, %20, %cst_11 [1] : vector<8x128xf32> to vector<8xf32>
    %22 = vector.shape_cast %21 : vector<8xf32> to vector<8x1xf32>
    %cst_12 = arith.constant 1.280000e+02 : f32
    %23 = vector.broadcast %cst_12 : f32 to vector<8x1xf32>
    %24 = arith.divf %22, %23 : vector<8x1xf32>
    %25 = arith.mulf %19, %19 : vector<8x1xf32>
    %26 = arith.subf %24, %25 : vector<8x1xf32>
    %27 = vector.broadcast %19 : vector<8x1xf32> to vector<8x128xf32>
    %28 = arith.subf %15, %27 : vector<8x128xf32>
    %cst_13 = arith.constant 9.99999974E-6 : f32
    %29 = vector.broadcast %cst_13 : f32 to vector<8x1xf32>
    %30 = arith.addf %26, %29 : vector<8x1xf32>
    %31 = math.rsqrt %30 : vector<8x1xf32>
    %32 = vector.broadcast %31 : vector<8x1xf32> to vector<8x128xf32>
    %33 = arith.mulf %28, %32 : vector<8x128xf32>
    %c0_14 = arith.constant 0 : index
    %c0_15 = arith.constant 0 : index
    %34 = vector.load %arg5[%c0_14, %c0_15] : memref<128x128xf32, #tpu.memory_space<vmem>>, vector<128x128xf32>
    %cst_16 = arith.constant dense<0.000000e+00> : vector<8x128xf32>
    %35 = tpu.matmul %33, %34, %cst_16 {dimension_numbers = #tpu.dot_dimension_numbers<[1], [0], [0], [1], [0, 0, 1, 1], [], []>, precision = #tpu.contract_precision<fp32>} : vector<8x128xf32>, vector<128x128xf32>, vector<8x128xf32> -> vector<8x128xf32>
    %cst_17 = arith.constant 0.000000e+00 : f32
    %36 = vector.broadcast %cst_17 : f32 to vector<8x128xf32>
    %37 = arith.maximumf %35, %36 : vector<8x128xf32>
    %c0_18 = arith.constant 0 : index
    %c0_19 = arith.constant 0 : index
    %38 = vector.load %arg2[%c0_18, %c0_19] : memref<8x32xf32, #tpu.memory_space<vmem>>, vector<8x32xf32>
    %c0_20 = arith.constant 0 : index
    %c0_21 = arith.constant 0 : index
    %39 = vector.load %arg6[%c0_20, %c0_21] : memref<8x160xf32, #tpu.memory_space<vmem>>, vector<8x32xf32>
    tpu.vector_store %arg6[%c0_20, %c0_21], %38 {strides = array<i32>} : memref<8x160xf32, #tpu.memory_space<vmem>>, vector<8x32xf32>,
    %c0_22 = arith.constant 0 : index
    %c32 = arith.constant 32 : index
    %40 = vector.load %arg6[%c0_22, %c32] : memref<8x160xf32, #tpu.memory_space<vmem>>, vector<8x128xf32>
    tpu.vector_store %arg6[%c0_22, %c32], %37 {strides = array<i32>} : memref<8x160xf32, #tpu.memory_space<vmem>>, vector<8x128xf32>,
    return
  }
  func.func @transform_0(%arg0: i32) -> (i32, i32) {
    %c0_i32 = arith.constant 0 : i32
    %c0_i32_0 = arith.constant 0 : i32
    return %arg0, %c0_i32 : i32, i32
  }
  func.func @transform_1(%arg0: i32) -> (i32, i32) {
    %c0_i32 = arith.constant 0 : i32
    %c0_i32_0 = arith.constant 0 : i32
    return %arg0, %c0_i32 : i32, i32
  }
  func.func @transform_2(%arg0: i32) -> (i32, i32) {
    %c0_i32 = arith.constant 0 : i32
    %c0_i32_0 = arith.constant 0 : i32
    %c0_i32_1 = arith.constant 0 : i32
    return %c0_i32, %c0_i32_0 : i32, i32
  }
  func.func @transform_3(%arg0: i32) -> (i32, i32) {
    %c0_i32 = arith.constant 0 : i32
    %c0_i32_0 = arith.constant 0 : i32
    %c0_i32_1 = arith.constant 0 : i32
    return %c0_i32, %c0_i32_0 : i32, i32
  }
  func.func @transform_4(%arg0: i32) -> (i32, i32) {
    %c0_i32 = arith.constant 0 : i32
    %c0_i32_0 = arith.constant 0 : i32
    %c0_i32_1 = arith.constant 0 : i32
    return %c0_i32, %c0_i32_0 : i32, i32
  }
  func.func @transform_5(%arg0: i32) -> (i32, i32) {
    %c0_i32 = arith.constant 0 : i32
    %c0_i32_0 = arith.constant 0 : i32
    return %arg0, %c0_i32 : i32, i32
  }
}

</mosaic_0001>

<llo_original>
// kernel: tpu_custom_call.1
$region0: #{tpu_custom_call.1}
  #allocation0 [shape = 'u32[]', space=smem, size = 0x4, offset = 0x4, fixed_abs, tag = 'smem constant byte address 0x4 - core index']
  #allocation1 [shape = 'u32[72,128]{1,0:T(1,128)}', space=vmem, size = 0x9000, scoped, tag = 'internal scratch']
  %s0 = inlined_call_operand.hbm [shape: f32[16,112], index: 0, kind: input, shape index: {}]
  %s1 = inlined_call_operand.hbm [shape: f32[16,32], index: 1, kind: input, shape index: {}]
  %s2 = inlined_call_operand.hbm [shape: f32[112,112], index: 2, kind: input, shape index: {}]
  %s3 = inlined_call_operand.hbm [shape: f32[112,128], index: 3, kind: input, shape index: {}]
  %s4 = inlined_call_operand.hbm [shape: f32[128,128], index: 4, kind: input, shape index: {}]
  %s5 = inlined_call_operand.hbm [shape: f32[16,160], index: 5, kind: output, shape index: {}]
  %s6 = sld [smem:[#allocation0]]
  $region73: #{tpu_custom_call.1} parent=0
    _
  %s8 = ssub.s32 1, %s6
  %s9 = scalar_select 0, %s8, %s6
  $region1: #{tpu_custom_call.1} parent=0
    #allocation2 [shape = 'u8[8192]{0}', space=vmem, size = 0x2000, scoped, tag = 'input window, operand 0']
    #allocation3 [shape = 's32[2]{0}', space=sflag, size = 0x8, scoped, tag = 'scoped memory for tpu_custom_call.1']
    #allocation4 [shape = 's32[2]{0}', space=sflag, size = 0x8, scoped, tag = 'scoped memory for tpu_custom_call.1']
    #allocation5 [shape = 'u8[8192]{0}', space=vmem, size = 0x2000, scoped, tag = 'input window, operand 1']
    #allocation6 [shape = 's32[2]{0}', space=sflag, size = 0x8, scoped, tag = 'scoped memory for tpu_custom_call.1']
    #allocation7 [shape = 'u8[57344]{0}', space=vmem, size = 0xe000, scoped, tag = 'input window, operand 2, single buffered']
    #allocation8 [shape = 'u8[57344]{0}', space=vmem, size = 0xe000, scoped, tag = 'input window, operand 3, single buffered']
    #allocation9 [shape = 's32[1]{0}', space=sflag, size = 0x4, scoped, tag = 'scoped memory for tpu_custom_call.1']
    #allocation10 [shape = 'u8[65536]{0}', space=vmem, size = 0x10000, scoped, tag = 'input window, operand 4, single buffered']
    #allocation11 [shape = 'u8[16384]{0}', space=vmem, size = 0x4000, scoped, tag = 'output window, operand 0']
    %10 = vsyncpa [#allocation3], 0
    %s11 = scalar_lea.sflag [#allocation3], 1
    %12 = vsyncpa %s11, 0
    %13 = vsyncpa [#allocation6], 0
    %s14 = scalar_lea.sflag [#allocation6], 1
    %15 = vsyncpa %s14, 0
    %16 = vsyncpa [#allocation9], 0
    %17 = vsyncpa [#allocation4], 0
    %s18 = scalar_lea.sflag [#allocation4], 1
    %19 = vsyncpa %s18, 0
    loop: start=0, step=1, limit=4
    $region2: #{tpu_custom_call.1} parent=1 // loop_pre_header
      _
    $region3: #{tpu_custom_call.1} parent=1 // loop_header
      %s21 = sphi 0, %s25
      %p22 = scmp.ge.s32.totalorder %s21, 4
      %s31 = sphi 0, %s33
      %s34 = sphi 0, %s31
      %s35 = sphi 0, %s34
      %s51 = sphi 0, %s35
      %s57 = sphi 0, %s59
      %s60 = sphi 0, %s57
      %s61 = sphi 0, %s60
      %s77 = sphi 0, %s61
      %s81 = sphi 0, %s81
      %s83 = sphi 0, %s81
      %s84 = sphi 0, %s83
      %s98 = sphi 0, %s84
      %s102 = sphi 0, %s102
      %s104 = sphi 0, %s102
      %s105 = sphi 0, %s104
      %s119 = sphi 0, %s105
      %s123 = sphi 0, %s123
      %s125 = sphi 0, %s123
      %s126 = sphi 0, %s125
      %s140 = sphi 0, %s126
      %s146 = sphi 0, %s148
      %s149 = sphi 0, %s146
      %s150 = sphi 0, %s149
      %s166 = sphi 0, %s150
    $region4: #{tpu_custom_call.1} parent=1 // loop_header_branch
      %24 = sbr.rel (%p22) target = $region8
    $region5: #{tpu_custom_call.1} parent=1 // loop_body
      %s26 = ssub.s32 %s21, 1
      %s27 = ssub.s32 %s21, 2
      %s28 = sadd.s32 %s21, 1
      %s29 = ssub.s32 %s21, %s28
      %p30 = scmp.eq.s32.totalorder %s29, 0
      %s32 = sadd.s32 %s31, 1
      %s33 = scalar_select %p30, %s31, %s32
      %p36 = pneg %p30
      %p37 = scmp.eq.s32.totalorder %s21, 1
      %p38 = por %p36, %p37
      %p39 = scmp.ne.s32.totalorder %s31, %s34
      %p40 = scmp.eq.s32.totalorder %s21, 0
      %p41 = por %p39, %p40
      %p42 = scmp.ne.s32.totalorder %s31, %s34
      %p43 = scmp.eq.s32.totalorder %s26, 1
      %p44 = por %p42, %p43
      %p45 = scmp.ne.s32.totalorder %s34, %s35
      %p46 = scmp.eq.s32.totalorder %s26, 0
      %p47 = por %p45, %p46
      %p48 = scmp.ne.s32.totalorder %s34, %s35
      %p49 = scmp.eq.s32.totalorder %s27, 1
      %p50 = por %p48, %p49
      %p52 = scmp.ne.s32.totalorder %s35, %s51
      %p53 = scmp.eq.s32.totalorder %s27, 0
      %p54 = por %p52, %p53
      %s55 = ssub.s32 %s21, %s28
      %p56 = scmp.eq.s32.totalorder %s55, 0
      %s58 = sadd.s32 %s57, 1
      %s59 = scalar_select %p56, %s57, %s58
      %p62 = pneg %p56
      %p63 = scmp.eq.s32.totalorder %s21, 1
      %p64 = por %p62, %p63
      %p65 = scmp.ne.s32.totalorder %s57, %s60
      %p66 = scmp.eq.s32.totalorder %s21, 0
      %p67 = por %p65, %p66
      %p68 = scmp.ne.s32.totalorder %s57, %s60
      %p69 = scmp.eq.s32.totalorder %s26, 1
      %p70 = por %p68, %p69
      %p71 = scmp.ne.s32.totalorder %s60, %s61
      %p72 = scmp.eq.s32.totalorder %s26, 0
      %p73 = por %p71, %p72
      %p74 = scmp.ne.s32.totalorder %s60, %s61
      %p75 = scmp.eq.s32.totalorder %s27, 1
      %p76 = por %p74, %p75
      %p78 = scmp.ne.s32.totalorder %s61, %s77
      %p79 = scmp.eq.s32.totalorder %s27, 0
      %p80 = por %p78, %p79
      %s82 = sadd.s32 %s81, 1
      %p85 = scmp.eq.s32.totalorder %s21, 1
      %p86 = scmp.ne.s32.totalorder %s81, %s83
      %p87 = scmp.eq.s32.totalorder %s21, 0
      %p88 = por %p86, %p87
      %p89 = scmp.ne.s32.totalorder %s81, %s83
      %p90 = scmp.eq.s32.totalorder %s26, 1
      %p91 = por %p89, %p90
      %p92 = scmp.ne.s32.totalorder %s83, %s84
      %p93 = scmp.eq.s32.totalorder %s26, 0
      %p94 = por %p92, %p93
      %p95 = scmp.ne.s32.totalorder %s83, %s84
      %p96 = scmp.eq.s32.totalorder %s27, 1
      %p97 = por %p95, %p96
      %p99 = scmp.ne.s32.totalorder %s84, %s98
      %p100 = scmp.eq.s32.totalorder %s27, 0
      %p101 = por %p99, %p100
      %s103 = sadd.s32 %s102, 1
      %p106 = scmp.eq.s32.totalorder %s21, 1
      %p107 = scmp.ne.s32.totalorder %s102, %s104
      %p108 = scmp.eq.s32.totalorder %s21, 0
      %p109 = por %p107, %p108
      %p110 = scmp.ne.s32.totalorder %s102, %s104
      %p111 = scmp.eq.s32.totalorder %s26, 1
      %p112 = por %p110, %p111
      %p113 = scmp.ne.s32.totalorder %s104, %s105
      %p114 = scmp.eq.s32.totalorder %s26, 0
      %p115 = por %p113, %p114
      %p116 = scmp.ne.s32.totalorder %s104, %s105
      %p117 = scmp.eq.s32.totalorder %s27, 1
      %p118 = por %p116, %p117
      %p120 = scmp.ne.s32.totalorder %s105, %s119
      %p121 = scmp.eq.s32.totalorder %s27, 0
      %p122 = por %p120, %p121
      %s124 = sadd.s32 %s123, 1
      %p127 = scmp.eq.s32.totalorder %s21, 1
      %p128 = scmp.ne.s32.totalorder %s123, %s125
      %p129 = scmp.eq.s32.totalorder %s21, 0
      %p130 = por %p128, %p129
      %p131 = scmp.ne.s32.totalorder %s123, %s125
      %p132 = scmp.eq.s32.totalorder %s26, 1
      %p133 = por %p131, %p132
      %p134 = scmp.ne.s32.totalorder %s125, %s126
      %p135 = scmp.eq.s32.totalorder %s26, 0
      %p136 = por %p134, %p135
      %p137 = scmp.ne.s32.totalorder %s125, %s126
      %p138 = scmp.eq.s32.totalorder %s27, 1
      %p139 = por %p137, %p138
      %p141 = scmp.ne.s32.totalorder %s126, %s140
      %p142 = scmp.eq.s32.totalorder %s27, 0
      %p143 = por %p141, %p142
      %s144 = ssub.s32 %s21, %s28
      %p145 = scmp.eq.s32.totalorder %s144, 0
      %s147 = sadd.s32 %s146, 1
      %s148 = scalar_select %p145, %s146, %s147
      %p151 = pneg %p145
      %p152 = scmp.eq.s32.totalorder %s21, 1
      %p153 = por %p151, %p152
      %p154 = scmp.ne.s32.totalorder %s146, %s149
      %p155 = scmp.eq.s32.totalorder %s21, 0
      %p156 = por %p154, %p155
      %p157 = scmp.ne.s32.totalorder %s146, %s149
      %p158 = scmp.eq.s32.totalorder %s26, 1
      %p159 = por %p157, %p158
      %p160 = scmp.ne.s32.totalorder %s149, %s150
      %p161 = scmp.eq.s32.totalorder %s26, 0
      %p162 = por %p160, %p161
      %p163 = scmp.ne.s32.totalorder %s149, %s150
      %p164 = scmp.eq.s32.totalorder %s27, 1
      %p165 = por %p163, %p164
      %p167 = scmp.ne.s32.totalorder %s150, %s166
      %p168 = scmp.eq.s32.totalorder %s27, 0
      %p169 = por %p167, %p168
      %p170 = scmp.le.s32.totalorder 1, %s21
      %p171 = scmp.lt.s32.totalorder %s21, 3
      %p172 = pnand %p170, %p171
      %p173 = pneg %p172
      // Predicated region
      $region9: #{tpu_custom_call.1} parent=5 // pred_check
        _
      $region10: #{tpu_custom_call.1} parent=5 // pred_check_branch
        %175 = sbr.rel (%p172) target = $region12
      $region11: #{tpu_custom_call.1} parent=5 // pred_region
        %s176 = ssub.s32 %s21, 1
        // Predicated region
        $region13: #{tpu_custom_call.1} parent=11 // pred_check
          %p177 = pneg %p94
        $region14: #{tpu_custom_call.1} parent=11 // pred_check_branch
          %179 = sbr.rel (%p177) target = $region16
        $region15: #{tpu_custom_call.1} parent=11 // pred_region
          %181 = vsyncadd [#allocation6], 0
          %s182 = sshll.u32 %s2, 4
          %s183 = int_to_ptr.hbm [resolvable:$true] %s182
          %s184 = sshll.u32 [#allocation7], 4
          %s185 = int_to_ptr.vmem [resolvable:$true] %s184
          %190 = dma.hbm_to_vmem [thread:$0]  %s183, 1792, %s185, [#allocation6], 128, 128, 8
        $region16: #{tpu_custom_call.1} parent=11 // pred_fallthru
          _
        // Predicated region
        $region17: #{tpu_custom_call.1} parent=11 // pred_check
          %p191 = pneg %p115
        $region18: #{tpu_custom_call.1} parent=11 // pred_check_branch
          %193 = sbr.rel (%p191) target = $region20
        $region19: #{tpu_custom_call.1} parent=11 // pred_region
          %195 = vsyncadd [#allocation9], 0
          %s196 = sshll.u32 %s3, 4
          %s197 = int_to_ptr.hbm [resolvable:$true] %s196
          %s198 = sshll.u32 [#allocation8], 4
          %s199 = int_to_ptr.vmem [resolvable:$true] %s198
          %204 = dma.hbm_to_vmem [thread:$0]  %s197, 1792, %s199, [#allocation9], 128, 128, 8
        $region20: #{tpu_custom_call.1} parent=11 // pred_fallthru
          _
        // Predicated region
        $region21: #{tpu_custom_call.1} parent=11 // pred_check
          %p205 = pneg %p136
        $region22: #{tpu_custom_call.1} parent=11 // pred_check_branch
          %207 = sbr.rel (%p205) target = $region24
        $region23: #{tpu_custom_call.1} parent=11 // pred_region
          %209 = vsyncadd [#allocation9], 0
          %s210 = sshll.u32 %s4, 4
          %s211 = int_to_ptr.hbm [resolvable:$true] %s210
          %s212 = sshll.u32 [#allocation10], 4
          %s213 = int_to_ptr.vmem [resolvable:$true] %s212
          %218 = dma.hbm_to_vmem [thread:$0]  %s211, 2048, %s213, [#allocation9], 128, 128, 8
        $region24: #{tpu_custom_call.1} parent=11 // pred_fallthru
          _
      $region12: #{tpu_custom_call.1} parent=5 // pred_fallthru
        _
      %p219 = scmp.lt.s32.totalorder %s21, 2
      // Predicated region
      $region25: #{tpu_custom_call.1} parent=5 // pred_check
        %p220 = pneg %p219
      $region26: #{tpu_custom_call.1} parent=5 // pred_check_branch
        %222 = sbr.rel (%p220) target = $region28
      $region27: #{tpu_custom_call.1} parent=5 // pred_region
        // Predicated region
        $region29: #{tpu_custom_call.1} parent=27 // pred_check
          %p223 = pneg %p41
        $region30: #{tpu_custom_call.1} parent=27 // pred_check_branch
          %225 = sbr.rel (%p223) target = $region32
        $region31: #{tpu_custom_call.1} parent=27 // pred_region
          %s226 = sand.u32 %s31, 1
          %s227 = scalar_lea.sflag [#allocation3], %s226
          %s228 = sand.u32 %s31, 1
          %s229 = smul.addr %s228, 8
          %s230 = scalar_lea.vmem [#allocation2], %s229
          %232 = vsyncadd %s227, 0
          %s233 = smul.addr %s21, 8
          %s234 = scalar_lea.hbm %s0, %s233
          %s236 = sshll.u32 %s234, 4
          %s237 = int_to_ptr.hbm [resolvable:$true] %s236
          %s238 = sshll.u32 %s230, 4
          %s239 = int_to_ptr.vmem [resolvable:$true] %s238
          %241 = dma.hbm_to_vmem [thread:$0]  %s237, 128, %s239, %s227
        $region32: #{tpu_custom_call.1} parent=27 // pred_fallthru
          _
        // Predicated region
        $region33: #{tpu_custom_call.1} parent=27 // pred_check
          %p242 = pneg %p67
        $region34: #{tpu_custom_call.1} parent=27 // pred_check_branch
          %244 = sbr.rel (%p242) target = $region36
        $region35: #{tpu_custom_call.1} parent=27 // pred_region
          %s245 = sand.u32 %s21, 1
          %s246 = scalar_lea.sflag [#allocation6], %s245
          %s247 = sand.u32 %s57, 1
          %s248 = smul.addr %s247, 8
          %s249 = scalar_lea.vmem [#allocation5], %s248
          %251 = vsyncadd %s246, 0
          %s252 = smul.addr %s21, 8
          %s253 = scalar_lea.hbm %s1, %s252
          %s255 = sshll.u32 %s253, 4
          %s256 = int_to_ptr.hbm [resolvable:$true] %s255
          %s257 = sshll.u32 %s249, 4
          %s258 = int_to_ptr.vmem [resolvable:$true] %s257
          %260 = dma.hbm_to_vmem [thread:$0]  %s256, 128, %s258, %s246
        $region36: #{tpu_custom_call.1} parent=27 // pred_fallthru
          _
      $region28: #{tpu_custom_call.1} parent=5 // pred_fallthru
        _
      %p261 = scmp.le.s32.totalorder 1, %s21
      %p262 = scmp.lt.s32.totalorder %s21, 3
      %p263 = pnand %p261, %p262
      %p264 = pneg %p263
      // Predicated region
      $region37: #{tpu_custom_call.1} parent=5 // pred_check
        _
      $region38: #{tpu_custom_call.1} parent=5 // pred_check_branch
        %266 = sbr.rel (%p263) target = $region40
      $region39: #{tpu_custom_call.1} parent=5 // pred_region
        %s267 = ssub.s32 %s21, 1
        %s268 = sand.u32 %s34, 1
        %s269 = scalar_lea.sflag [#allocation3], %s268
        %s270 = sand.u32 %s34, 1
        %s271 = smul.addr %s270, 8
        %s272 = scalar_lea.vmem [#allocation2], %s271
        // Predicated region
        $region41: #{tpu_custom_call.1} parent=39 // pred_check
          %p273 = pneg %p47
        $region42: #{tpu_custom_call.1} parent=39 // pred_check_branch
          %275 = sbr.rel (%p273) target = $region44
        $region43: #{tpu_custom_call.1} parent=39 // pred_region
          %277 = dma.done %s269, 128
        $region44: #{tpu_custom_call.1} parent=39 // pred_fallthru
          _
        %s278 = sand.u32 %s26, 1
        %s279 = scalar_lea.sflag [#allocation6], %s278
        %s280 = sand.u32 %s60, 1
        %s281 = smul.addr %s280, 8
        %s282 = scalar_lea.vmem [#allocation5], %s281
        // Predicated region
        $region45: #{tpu_custom_call.1} parent=39 // pred_check
          %p283 = pneg %p73
        $region46: #{tpu_custom_call.1} parent=39 // pred_check_branch
          %285 = sbr.rel (%p283) target = $region48
        $region47: #{tpu_custom_call.1} parent=39 // pred_region
          %287 = dma.done %s279, 128
        $region48: #{tpu_custom_call.1} parent=39 // pred_fallthru
          _
        // Predicated region
        $region49: #{tpu_custom_call.1} parent=39 // pred_check
          %p288 = pneg %p94
        $region50: #{tpu_custom_call.1} parent=39 // pred_check_branch
          %290 = sbr.rel (%p288) target = $region52
        $region51: #{tpu_custom_call.1} parent=39 // pred_region
          %292 = dma.done [#allocation6], 1792
        $region52: #{tpu_custom_call.1} parent=39 // pred_fallthru
          _
        // Predicated region
        $region53: #{tpu_custom_call.1} parent=39 // pred_check
          %p293 = pneg %p115
        $region54: #{tpu_custom_call.1} parent=39 // pred_check_branch
          %295 = sbr.rel (%p293) target = $region56
        $region55: #{tpu_custom_call.1} parent=39 // pred_region
          %297 = dma.done [#allocation9], 1792
        $region56: #{tpu_custom_call.1} parent=39 // pred_fallthru
          _
        // Predicated region
        $region57: #{tpu_custom_call.1} parent=39 // pred_check
          %p298 = pneg %p136
        $region58: #{tpu_custom_call.1} parent=39 // pred_check_branch
          %300 = sbr.rel (%p298) target = $region60
        $region59: #{tpu_custom_call.1} parent=39 // pred_region
          %302 = dma.done [#allocation9], 2048
        $region60: #{tpu_custom_call.1} parent=39 // pred_fallthru
          _
        %s303 = sand.u32 %s34, 1
        %s304 = scalar_lea.sflag [#allocation3], %s303
        %s305 = sand.u32 %s34, 1
        %s306 = smul.addr %s305, 8
        %s307 = scalar_lea.vmem [#allocation2], %s306
        %p308 = pneg %p47
        %p309 = pneg %p44
        %s310 = sand.u32 %s26, 1
        %s311 = scalar_lea.sflag [#allocation6], %s310
        %s312 = sand.u32 %s60, 1
        %s313 = smul.addr %s312, 8
        %s314 = scalar_lea.vmem [#allocation5], %s313
        %p315 = pneg %p73
        %p316 = pneg %p70
        %p317 = pneg %p94
        %p318 = pneg %p91
        %p319 = pneg %p115
        %p320 = pneg %p112
        %p321 = pneg %p136
        %p322 = pneg %p133
        %p323 = pneg %p162
        %p324 = pneg %p159
        %s325 = sand.u32 %s149, 1
        %s326 = scalar_lea.sflag [#allocation4], %s325
        %s327 = sand.u32 %s149, 1
        %s328 = smul.addr %s327, 16
        %s329 = scalar_lea.vmem [#allocation11], %s328
        %v330 = vld [vmem:[%s272] sm:$0xff]
        %v331 = vld [vmem:[#allocation7] sm:$0xff]
        %v332 = vld [vmem:[#allocation7 + $0x8] sm:$0xff]
        %v333 = vld [vmem:[#allocation7 + $0x10] sm:$0xff]
        %v334 = vld [vmem:[#allocation7 + $0x18] sm:$0xff]
        %v335 = vld [vmem:[#allocation7 + $0x20] sm:$0xff]
        %v336 = vld [vmem:[#allocation7 + $0x28] sm:$0xff]
        %v337 = vld [vmem:[#allocation7 + $0x30] sm:$0xff]
        %v338 = vld [vmem:[#allocation7 + $0x38] sm:$0xff]
        %v339 = vld [vmem:[#allocation7 + $0x40] sm:$0xff]
        %v340 = vld [vmem:[#allocation7 + $0x48] sm:$0xff]
        %v341 = vld [vmem:[#allocation7 + $0x50] sm:$0xff]
        %v342 = vld [vmem:[#allocation7 + $0x58] sm:$0xff]
        %v343 = vld [vmem:[#allocation7 + $0x60] sm:$0xff]
        %v344 = vld [vmem:[#allocation7 + $0x68] sm:$0xff]
        %vm345 = vcmask 916480
        %v347 = vsel %vm345, %v330, 0
        %349 = vmatpush.msra.mxu0 0.0
        %350 = vmatpush.msra.mxu0 0.0
        %v351 = vand.u32 %v344, 4294901760
        %352 = vmatpush.msra.mxu0 %v351
        %v353 = vand.u32 %v343, 4294901760
        %354 = vmatpush.msra.mxu0 %v353
        %v355 = vand.u32 %v342, 4294901760
        %356 = vmatpush.msra.mxu0 %v355
        %v357 = vand.u32 %v341, 4294901760
        %358 = vmatpush.msra.mxu0 %v357
        %v359 = vand.u32 %v340, 4294901760
        %360 = vmatpush.msra.mxu0 %v359
        %v361 = vand.u32 %v339, 4294901760
        %362 = vmatpush.msra.mxu0 %v361
        %v363 = vand.u32 %v338, 4294901760
        %364 = vmatpush.msra.mxu0 %v363
        %v365 = vand.u32 %v337, 4294901760
        %366 = vmatpush.msra.mxu0 %v365
        %v367 = vand.u32 %v336, 4294901760
        %368 = vmatpush.msra.mxu0 %v367
        %v369 = vand.u32 %v335, 4294901760
        %370 = vmatpush.msra.mxu0 %v369
        %v371 = vand.u32 %v334, 4294901760
        %372 = vmatpush.msra.mxu0 %v371
        %v373 = vand.u32 %v333, 4294901760
        %374 = vmatpush.msra.mxu0 %v373
        %v375 = vand.u32 %v332, 4294901760
        %376 = vmatpush.msra.mxu0 %v375
        %v377 = vand.u32 %v331, 4294901760
        %378 = vmatpush.msra.mxu0 %v377
        %v379 = vand.u32 %v347, 4294901760
        %v380 = vsub.f32 %v347, %v379
        %v381 = vand.u32 %v380, 4294901760
        %v382 = vsub.f32 %v380, %v381
        %v383 = vand.u32 %v382, 4294901760
        %384 = vmatmul.f32.gmra.mxu0 %v383
        %v385 = vpop.f32.mrf.mxu0
        %v386 = vadd.f32 0.0, %v385
        %387 = vdwg.mxu0
        %388 = vmatpush.msra.mxu0 0.0
        %389 = vmatpush.msra.mxu0 0.0
        %v390 = vand.u32 %v344, 4294901760
        %v391 = vsub.f32 %v344, %v390
        %v392 = vand.u32 %v391, 4294901760
        %v393 = vsub.f32 %v391, %v392
        %v394 = vand.u32 %v393, 4294901760
        %395 = vmatpush.msra.mxu0 %v394
        %v396 = vand.u32 %v343, 4294901760
        %v397 = vsub.f32 %v343, %v396
        %v398 = vand.u32 %v397, 4294901760
        %v399 = vsub.f32 %v397, %v398
        %v400 = vand.u32 %v399, 4294901760
        %401 = vmatpush.msra.mxu0 %v400
        %v402 = vand.u32 %v342, 4294901760
        %v403 = vsub.f32 %v342, %v402
        %v404 = vand.u32 %v403, 4294901760
        %v405 = vsub.f32 %v403, %v404
        %v406 = vand.u32 %v405, 4294901760
        %407 = vmatpush.msra.mxu0 %v406
        %v408 = vand.u32 %v341, 4294901760
        %v409 = vsub.f32 %v341, %v408
        %v410 = vand.u32 %v409, 4294901760
        %v411 = vsub.f32 %v409, %v410
        %v412 = vand.u32 %v411, 4294901760
        %413 = vmatpush.msra.mxu0 %v412
        %v414 = vand.u32 %v340, 4294901760
        %v415 = vsub.f32 %v340, %v414
        %v416 = vand.u32 %v415, 4294901760
        %v417 = vsub.f32 %v415, %v416
        %v418 = vand.u32 %v417, 4294901760
        %419 = vmatpush.msra.mxu0 %v418
        %v420 = vand.u32 %v339, 4294901760
        %v421 = vsub.f32 %v339, %v420
        %v422 = vand.u32 %v421, 4294901760
        %v423 = vsub.f32 %v421, %v422
        %v424 = vand.u32 %v423, 4294901760
        %425 = vmatpush.msra.mxu0 %v424
        %v426 = vand.u32 %v338, 4294901760
        %v427 = vsub.f32 %v338, %v426
        %v428 = vand.u32 %v427, 4294901760
        %v429 = vsub.f32 %v427, %v428
        %v430 = vand.u32 %v429, 4294901760
        %431 = vmatpush.msra.mxu0 %v430
        %v432 = vand.u32 %v337, 4294901760
        %v433 = vsub.f32 %v337, %v432
        %v434 = vand.u32 %v433, 4294901760
        %v435 = vsub.f32 %v433, %v434
        %v436 = vand.u32 %v435, 4294901760
        %437 = vmatpush.msra.mxu0 %v436
        %v438 = vand.u32 %v336, 4294901760
        %v439 = vsub.f32 %v336, %v438
        %v440 = vand.u32 %v439, 4294901760
        %v441 = vsub.f32 %v439, %v440
        %v442 = vand.u32 %v441, 4294901760
        %443 = vmatpush.msra.mxu0 %v442
        %v444 = vand.u32 %v335, 4294901760
        %v445 = vsub.f32 %v335, %v444
        %v446 = vand.u32 %v445, 4294901760
        %v447 = vsub.f32 %v445, %v446
        %v448 = vand.u32 %v447, 4294901760
        %449 = vmatpush.msra.mxu0 %v448
        %v450 = vand.u32 %v334, 4294901760
        %v451 = vsub.f32 %v334, %v450
        %v452 = vand.u32 %v451, 4294901760
        %v453 = vsub.f32 %v451, %v452
        %v454 = vand.u32 %v453, 4294901760
        %455 = vmatpush.msra.mxu0 %v454
        %v456 = vand.u32 %v333, 4294901760
        %v457 = vsub.f32 %v333, %v456
        %v458 = vand.u32 %v457, 4294901760
        %v459 = vsub.f32 %v457, %v458
        %v460 = vand.u32 %v459, 4294901760
        %461 = vmatpush.msra.mxu0 %v460
        %v462 = vand.u32 %v332, 4294901760
        %v463 = vsub.f32 %v332, %v462
        %v464 = vand.u32 %v463, 4294901760
        %v465 = vsub.f32 %v463, %v464
        %v466 = vand.u32 %v465, 4294901760
        %467 = vmatpush.msra.mxu0 %v466
        %v468 = vand.u32 %v331, 4294901760
        %v469 = vsub.f32 %v331, %v468
        %v470 = vand.u32 %v469, 4294901760
        %v471 = vsub.f32 %v469, %v470
        %v472 = vand.u32 %v471, 4294901760
        %473 = vmatpush.msra.mxu0 %v472
        %v474 = vand.u32 %v347, 4294901760
        %475 = vmatmul.f32.gmra.mxu0 %v474
        %v476 = vpop.f32.mrf.mxu0
        %v477 = vadd.f32 %v386, %v476
        %478 = vdwg.mxu0
        %479 = vmatpush.msra.mxu0 0.0
        %480 = vmatpush.msra.mxu0 0.0
        %v481 = vand.u32 %v344, 4294901760
        %v482 = vsub.f32 %v344, %v481
        %483 = vmatpush.msra.mxu0 %v482
        %v484 = vand.u32 %v343, 4294901760
        %v485 = vsub.f32 %v343, %v484
        %486 = vmatpush.msra.mxu0 %v485
        %v487 = vand.u32 %v342, 4294901760
        %v488 = vsub.f32 %v342, %v487
        %489 = vmatpush.msra.mxu0 %v488
        %v490 = vand.u32 %v341, 4294901760
        %v491 = vsub.f32 %v341, %v490
        %492 = vmatpush.msra.mxu0 %v491
        %v493 = vand.u32 %v340, 4294901760
        %v494 = vsub.f32 %v340, %v493
        %495 = vmatpush.msra.mxu0 %v494
        %v496 = vand.u32 %v339, 4294901760
        %v497 = vsub.f32 %v339, %v496
        %498 = vmatpush.msra.mxu0 %v497
        %v499 = vand.u32 %v338, 4294901760
        %v500 = vsub.f32 %v338, %v499
        %501 = vmatpush.msra.mxu0 %v500
        %v502 = vand.u32 %v337, 4294901760
        %v503 = vsub.f32 %v337, %v502
        %504 = vmatpush.msra.mxu0 %v503
        %v505 = vand.u32 %v336, 4294901760
        %v506 = vsub.f32 %v336, %v505
        %507 = vmatpush.msra.mxu0 %v506
        %v508 = vand.u32 %v335, 4294901760
        %v509 = vsub.f32 %v335, %v508
        %510 = vmatpush.msra.mxu0 %v509
        %v511 = vand.u32 %v334, 4294901760
        %v512 = vsub.f32 %v334, %v511
        %513 = vmatpush.msra.mxu0 %v512
        %v514 = vand.u32 %v333, 4294901760
        %v515 = vsub.f32 %v333, %v514
        %516 = vmatpush.msra.mxu0 %v515
        %v517 = vand.u32 %v332, 4294901760
        %v518 = vsub.f32 %v332, %v517
        %519 = vmatpush.msra.mxu0 %v518
        %v520 = vand.u32 %v331, 4294901760
        %v521 = vsub.f32 %v331, %v520
        %522 = vmatpush.msra.mxu0 %v521
        %v523 = vand.u32 %v347, 4294901760
        %v524 = vsub.f32 %v347, %v523
        %525 = vmatmul.f32.gmra.mxu0 %v524
        %v526 = vpop.f32.mrf.mxu0
        %v527 = vadd.f32 %v477, %v526
        %528 = vdwg.mxu0
        %529 = vmatpush.msra.mxu0 0.0
        %530 = vmatpush.msra.mxu0 0.0
        %v531 = vand.u32 %v344, 4294901760
        %532 = vmatpush.msra.mxu0 %v531
        %v533 = vand.u32 %v343, 4294901760
        %534 = vmatpush.msra.mxu0 %v533
        %v535 = vand.u32 %v342, 4294901760
        %536 = vmatpush.msra.mxu0 %v535
        %v537 = vand.u32 %v341, 4294901760
        %538 = vmatpush.msra.mxu0 %v537
        %v539 = vand.u32 %v340, 4294901760
        %540 = vmatpush.msra.mxu0 %v539
        %v541 = vand.u32 %v339, 4294901760
        %542 = vmatpush.msra.mxu0 %v541
        %v543 = vand.u32 %v338, 4294901760
        %544 = vmatpush.msra.mxu0 %v543
        %v545 = vand.u32 %v337, 4294901760
        %546 = vmatpush.msra.mxu0 %v545
        %v547 = vand.u32 %v336, 4294901760
        %548 = vmatpush.msra.mxu0 %v547
        %v549 = vand.u32 %v335, 4294901760
        %550 = vmatpush.msra.mxu0 %v549
        %v551 = vand.u32 %v334, 4294901760
        %552 = vmatpush.msra.mxu0 %v551
        %v553 = vand.u32 %v333, 4294901760
        %554 = vmatpush.msra.mxu0 %v553
        %v555 = vand.u32 %v332, 4294901760
        %556 = vmatpush.msra.mxu0 %v555
        %v557 = vand.u32 %v331, 4294901760
        %558 = vmatpush.msra.mxu0 %v557
        %v559 = vand.u32 %v347, 4294901760
        %v560 = vsub.f32 %v347, %v559
        %v561 = vand.u32 %v560, 4294901760
        %562 = vmatmul.f32.gmra.mxu0 %v561
        %v563 = vpop.f32.mrf.mxu0
        %v564 = vadd.f32 %v527, %v563
        %565 = vdwg.mxu0
        %566 = vmatpush.msra.mxu0 0.0
        %567 = vmatpush.msra.mxu0 0.0
        %v568 = vand.u32 %v344, 4294901760
        %v569 = vsub.f32 %v344, %v568
        %v570 = vand.u32 %v569, 4294901760
        %571 = vmatpush.msra.mxu0 %v570
        %v572 = vand.u32 %v343, 4294901760
        %v573 = vsub.f32 %v343, %v572
        %v574 = vand.u32 %v573, 4294901760
        %575 = vmatpush.msra.mxu0 %v574
        %v576 = vand.u32 %v342, 4294901760
        %v577 = vsub.f32 %v342, %v576
        %v578 = vand.u32 %v577, 4294901760
        %579 = vmatpush.msra.mxu0 %v578
        %v580 = vand.u32 %v341, 4294901760
        %v581 = vsub.f32 %v341, %v580
        %v582 = vand.u32 %v581, 4294901760
        %583 = vmatpush.msra.mxu0 %v582
        %v584 = vand.u32 %v340, 4294901760
        %v585 = vsub.f32 %v340, %v584
        %v586 = vand.u32 %v585, 4294901760
        %587 = vmatpush.msra.mxu0 %v586
        %v588 = vand.u32 %v339, 4294901760
        %v589 = vsub.f32 %v339, %v588
        %v590 = vand.u32 %v589, 4294901760
        %591 = vmatpush.msra.mxu0 %v590
        %v592 = vand.u32 %v338, 4294901760
        %v593 = vsub.f32 %v338, %v592
        %v594 = vand.u32 %v593, 4294901760
        %595 = vmatpush.msra.mxu0 %v594
        %v596 = vand.u32 %v337, 4294901760
        %v597 = vsub.f32 %v337, %v596
        %v598 = vand.u32 %v597, 4294901760
        %599 = vmatpush.msra.mxu0 %v598
        %v600 = vand.u32 %v336, 4294901760
        %v601 = vsub.f32 %v336, %v600
        %v602 = vand.u32 %v601, 4294901760
        %603 = vmatpush.msra.mxu0 %v602
        %v604 = vand.u32 %v335, 4294901760
        %v605 = vsub.f32 %v335, %v604
        %v606 = vand.u32 %v605, 4294901760
        %607 = vmatpush.msra.mxu0 %v606
        %v608 = vand.u32 %v334, 4294901760
        %v609 = vsub.f32 %v334, %v608
        %v610 = vand.u32 %v609, 4294901760
        %611 = vmatpush.msra.mxu0 %v610
        %v612 = vand.u32 %v333, 4294901760
        %v613 = vsub.f32 %v333, %v612
        %v614 = vand.u32 %v613, 4294901760
        %615 = vmatpush.msra.mxu0 %v614
        %v616 = vand.u32 %v332, 4294901760
        %v617 = vsub.f32 %v332, %v616
        %v618 = vand.u32 %v617, 4294901760
        %619 = vmatpush.msra.mxu0 %v618
        %v620 = vand.u32 %v331, 4294901760
        %v621 = vsub.f32 %v331, %v620
        %v622 = vand.u32 %v621, 4294901760
        %623 = vmatpush.msra.mxu0 %v622
        %v624 = vand.u32 %v347, 4294901760
        %625 = vmatmul.f32.gmra.mxu0 %v624
        %v626 = vpop.f32.mrf.mxu0
        %v627 = vadd.f32 %v564, %v626
        %628 = vdwg.mxu0
        %629 = vmatpush.msra.mxu0 0.0
        %630 = vmatpush.msra.mxu0 0.0
        %v631 = vand.u32 %v344, 4294901760
        %632 = vmatpush.msra.mxu0 %v631
        %v633 = vand.u32 %v343, 4294901760
        %634 = vmatpush.msra.mxu0 %v633
        %v635 = vand.u32 %v342, 4294901760
        %636 = vmatpush.msra.mxu0 %v635
        %v637 = vand.u32 %v341, 4294901760
        %638 = vmatpush.msra.mxu0 %v637
        %v639 = vand.u32 %v340, 4294901760
        %640 = vmatpush.msra.mxu0 %v639
        %v641 = vand.u32 %v339, 4294901760
        %642 = vmatpush.msra.mxu0 %v641
        %v643 = vand.u32 %v338, 4294901760
        %644 = vmatpush.msra.mxu0 %v643
        %v645 = vand.u32 %v337, 4294901760
        %646 = vmatpush.msra.mxu0 %v645
        %v647 = vand.u32 %v336, 4294901760
        %648 = vmatpush.msra.mxu0 %v647
        %v649 = vand.u32 %v335, 4294901760
        %650 = vmatpush.msra.mxu0 %v649
        %v651 = vand.u32 %v334, 4294901760
        %652 = vmatpush.msra.mxu0 %v651
        %v653 = vand.u32 %v333, 4294901760
        %654 = vmatpush.msra.mxu0 %v653
        %v655 = vand.u32 %v332, 4294901760
        %656 = vmatpush.msra.mxu0 %v655
        %v657 = vand.u32 %v331, 4294901760
        %658 = vmatpush.msra.mxu0 %v657
        %v659 = vand.u32 %v347, 4294901760
        %660 = vmatmul.f32.gmra.mxu0 %v659
        %v661 = vpop.f32.mrf.mxu0
        %v662 = vadd.f32 %v627, %v661
        %663 = vdwg.mxu0
        %v664 = vmul.f32 %v330, %v330
        %v666 = vsel %vm345, %v664, 0
        %668 = vmatpush.msra.mxu0 0.0
        %669 = vmatpush.msra.mxu0 0.0
        %v670 = vand.u32 %v344, 4294901760
        %671 = vmatpush.msra.mxu0 %v670
        %v672 = vand.u32 %v343, 4294901760
        %673 = vmatpush.msra.mxu0 %v672
        %v674 = vand.u32 %v342, 4294901760
        %675 = vmatpush.msra.mxu0 %v674
        %v676 = vand.u32 %v341, 4294901760
        %677 = vmatpush.msra.mxu0 %v676
        %v678 = vand.u32 %v340, 4294901760
        %679 = vmatpush.msra.mxu0 %v678
        %v680 = vand.u32 %v339, 4294901760
        %681 = vmatpush.msra.mxu0 %v680
        %v682 = vand.u32 %v338, 4294901760
        %683 = vmatpush.msra.mxu0 %v682
        %v684 = vand.u32 %v337, 4294901760
        %685 = vmatpush.msra.mxu0 %v684
        %v686 = vand.u32 %v336, 4294901760
        %687 = vmatpush.msra.mxu0 %v686
        %v688 = vand.u32 %v335, 4294901760
        %689 = vmatpush.msra.mxu0 %v688
        %v690 = vand.u32 %v334, 4294901760
        %691 = vmatpush.msra.mxu0 %v690
        %v692 = vand.u32 %v333, 4294901760
        %693 = vmatpush.msra.mxu0 %v692
        %v694 = vand.u32 %v332, 4294901760
        %695 = vmatpush.msra.mxu0 %v694
        %v696 = vand.u32 %v331, 4294901760
        %697 = vmatpush.msra.mxu0 %v696
        %v698 = vand.u32 %v666, 4294901760
        %v699 = vsub.f32 %v666, %v698
        %v700 = vand.u32 %v699, 4294901760
        %v701 = vsub.f32 %v699, %v700
        %v702 = vand.u32 %v701, 4294901760
        %703 = vmatmul.f32.gmra.mxu0 %v702
        %v704 = vpop.f32.mrf.mxu0
        %v705 = vadd.f32 0.0, %v704
        %706 = vdwg.mxu0
        %707 = vmatpush.msra.mxu0 0.0
        %708 = vmatpush.msra.mxu0 0.0
        %v709 = vand.u32 %v344, 4294901760
        %v710 = vsub.f32 %v344, %v709
        %v711 = vand.u32 %v710, 4294901760
        %v712 = vsub.f32 %v710, %v711
        %v713 = vand.u32 %v712, 4294901760
        %714 = vmatpush.msra.mxu0 %v713
        %v715 = vand.u32 %v343, 4294901760
        %v716 = vsub.f32 %v343, %v715
        %v717 = vand.u32 %v716, 4294901760
        %v718 = vsub.f32 %v716, %v717
        %v719 = vand.u32 %v718, 4294901760
        %720 = vmatpush.msra.mxu0 %v719
        %v721 = vand.u32 %v342, 4294901760
        %v722 = vsub.f32 %v342, %v721
        %v723 = vand.u32 %v722, 4294901760
        %v724 = vsub.f32 %v722, %v723
        %v725 = vand.u32 %v724, 4294901760
        %726 = vmatpush.msra.mxu0 %v725
        %v727 = vand.u32 %v341, 4294901760
        %v728 = vsub.f32 %v341, %v727
        %v729 = vand.u32 %v728, 4294901760
        %v730 = vsub.f32 %v728, %v729
        %v731 = vand.u32 %v730, 4294901760
        %732 = vmatpush.msra.mxu0 %v731
        %v733 = vand.u32 %v340, 4294901760
        %v734 = vsub.f32 %v340, %v733
        %v735 = vand.u32 %v734, 4294901760
        %v736 = vsub.f32 %v734, %v735
        %v737 = vand.u32 %v736, 4294901760
        %738 = vmatpush.msra.mxu0 %v737
        %v739 = vand.u32 %v339, 4294901760
        %v740 = vsub.f32 %v339, %v739
        %v741 = vand.u32 %v740, 4294901760
        %v742 = vsub.f32 %v740, %v741
        %v743 = vand.u32 %v742, 4294901760
        %744 = vmatpush.msra.mxu0 %v743
        %v745 = vand.u32 %v338, 4294901760
        %v746 = vsub.f32 %v338, %v745
        %v747 = vand.u32 %v746, 4294901760
        %v748 = vsub.f32 %v746, %v747
        %v749 = vand.u32 %v748, 4294901760
        %750 = vmatpush.msra.mxu0 %v749
        %v751 = vand.u32 %v337, 4294901760
        %v752 = vsub.f32 %v337, %v751
        %v753 = vand.u32 %v752, 4294901760
        %v754 = vsub.f32 %v752, %v753
        %v755 = vand.u32 %v754, 4294901760
        %756 = vmatpush.msra.mxu0 %v755
        %v757 = vand.u32 %v336, 4294901760
        %v758 = vsub.f32 %v336, %v757
        %v759 = vand.u32 %v758, 4294901760
        %v760 = vsub.f32 %v758, %v759
        %v761 = vand.u32 %v760, 4294901760
        %762 = vmatpush.msra.mxu0 %v761
        %v763 = vand.u32 %v335, 4294901760
        %v764 = vsub.f32 %v335, %v763
        %v765 = vand.u32 %v764, 4294901760
        %v766 = vsub.f32 %v764, %v765
        %v767 = vand.u32 %v766, 4294901760
        %768 = vmatpush.msra.mxu0 %v767
        %v769 = vand.u32 %v334, 4294901760
        %v770 = vsub.f32 %v334, %v769
        %v771 = vand.u32 %v770, 4294901760
        %v772 = vsub.f32 %v770, %v771
        %v773 = vand.u32 %v772, 4294901760
        %774 = vmatpush.msra.mxu0 %v773
        %v775 = vand.u32 %v333, 4294901760
        %v776 = vsub.f32 %v333, %v775
        %v777 = vand.u32 %v776, 4294901760
        %v778 = vsub.f32 %v776, %v777
        %v779 = vand.u32 %v778, 4294901760
        %780 = vmatpush.msra.mxu0 %v779
        %v781 = vand.u32 %v332, 4294901760
        %v782 = vsub.f32 %v332, %v781
        %v783 = vand.u32 %v782, 4294901760
        %v784 = vsub.f32 %v782, %v783
        %v785 = vand.u32 %v784, 4294901760
        %786 = vmatpush.msra.mxu0 %v785
        %v787 = vand.u32 %v331, 4294901760
        %v788 = vsub.f32 %v331, %v787
        %v789 = vand.u32 %v788, 4294901760
        %v790 = vsub.f32 %v788, %v789
        %v791 = vand.u32 %v790, 4294901760
        %792 = vmatpush.msra.mxu0 %v791
        %v793 = vand.u32 %v666, 4294901760
        %794 = vmatmul.f32.gmra.mxu0 %v793
        %v795 = vpop.f32.mrf.mxu0
        %v796 = vadd.f32 %v705, %v795
        %797 = vdwg.mxu0
        %798 = vmatpush.msra.mxu0 0.0
        %799 = vmatpush.msra.mxu0 0.0
        %v800 = vand.u32 %v344, 4294901760
        %v801 = vsub.f32 %v344, %v800
        %802 = vmatpush.msra.mxu0 %v801
        %v803 = vand.u32 %v343, 4294901760
        %v804 = vsub.f32 %v343, %v803
        %805 = vmatpush.msra.mxu0 %v804
        %v806 = vand.u32 %v342, 4294901760
        %v807 = vsub.f32 %v342, %v806
        %808 = vmatpush.msra.mxu0 %v807
        %v809 = vand.u32 %v341, 4294901760
        %v810 = vsub.f32 %v341, %v809
        %811 = vmatpush.msra.mxu0 %v810
        %v812 = vand.u32 %v340, 4294901760
        %v813 = vsub.f32 %v340, %v812
        %814 = vmatpush.msra.mxu0 %v813
        %v815 = vand.u32 %v339, 4294901760
        %v816 = vsub.f32 %v339, %v815
        %817 = vmatpush.msra.mxu0 %v816
        %v818 = vand.u32 %v338, 4294901760
        %v819 = vsub.f32 %v338, %v818
        %820 = vmatpush.msra.mxu0 %v819
        %v821 = vand.u32 %v337, 4294901760
        %v822 = vsub.f32 %v337, %v821
        %823 = vmatpush.msra.mxu0 %v822
        %v824 = vand.u32 %v336, 4294901760
        %v825 = vsub.f32 %v336, %v824
        %826 = vmatpush.msra.mxu0 %v825
        %v827 = vand.u32 %v335, 4294901760
        %v828 = vsub.f32 %v335, %v827
        %829 = vmatpush.msra.mxu0 %v828
        %v830 = vand.u32 %v334, 4294901760
        %v831 = vsub.f32 %v334, %v830
        %832 = vmatpush.msra.mxu0 %v831
        %v833 = vand.u32 %v333, 4294901760
        %v834 = vsub.f32 %v333, %v833
        %835 = vmatpush.msra.mxu0 %v834
        %v836 = vand.u32 %v332, 4294901760
        %v837 = vsub.f32 %v332, %v836
        %838 = vmatpush.msra.mxu0 %v837
        %v839 = vand.u32 %v331, 4294901760
        %v840 = vsub.f32 %v331, %v839
        %841 = vmatpush.msra.mxu0 %v840
        %v842 = vand.u32 %v666, 4294901760
        %v843 = vsub.f32 %v666, %v842
        %844 = vmatmul.f32.gmra.mxu0 %v843
        %v845 = vpop.f32.mrf.mxu0
        %v846 = vadd.f32 %v796, %v845
        %847 = vdwg.mxu0
        %848 = vmatpush.msra.mxu0 0.0
        %849 = vmatpush.msra.mxu0 0.0
        %v850 = vand.u32 %v344, 4294901760
        %851 = vmatpush.msra.mxu0 %v850
        %v852 = vand.u32 %v343, 4294901760
        %853 = vmatpush.msra.mxu0 %v852
        %v854 = vand.u32 %v342, 4294901760
        %855 = vmatpush.msra.mxu0 %v854
        %v856 = vand.u32 %v341, 4294901760
        %857 = vmatpush.msra.mxu0 %v856
        %v858 = vand.u32 %v340, 4294901760
        %859 = vmatpush.msra.mxu0 %v858
        %v860 = vand.u32 %v339, 4294901760
        %861 = vmatpush.msra.mxu0 %v860
        %v862 = vand.u32 %v338, 4294901760
        %863 = vmatpush.msra.mxu0 %v862
        %v864 = vand.u32 %v337, 4294901760
        %865 = vmatpush.msra.mxu0 %v864
        %v866 = vand.u32 %v336, 4294901760
        %867 = vmatpush.msra.mxu0 %v866
        %v868 = vand.u32 %v335, 4294901760
        %869 = vmatpush.msra.mxu0 %v868
        %v870 = vand.u32 %v334, 4294901760
        %871 = vmatpush.msra.mxu0 %v870
        %v872 = vand.u32 %v333, 4294901760
        %873 = vmatpush.msra.mxu0 %v872
        %v874 = vand.u32 %v332, 4294901760
        %875 = vmatpush.msra.mxu0 %v874
        %v876 = vand.u32 %v331, 4294901760
        %877 = vmatpush.msra.mxu0 %v876
        %v878 = vand.u32 %v666, 4294901760
        %v879 = vsub.f32 %v666, %v878
        %v880 = vand.u32 %v879, 4294901760
        %881 = vmatmul.f32.gmra.mxu0 %v880
        %v882 = vpop.f32.mrf.mxu0
        %v883 = vadd.f32 %v846, %v882
        %884 = vdwg.mxu0
        %885 = vmatpush.msra.mxu0 0.0
        %886 = vmatpush.msra.mxu0 0.0
        %v887 = vand.u32 %v344, 4294901760
        %v888 = vsub.f32 %v344, %v887
        %v889 = vand.u32 %v888, 4294901760
        %890 = vmatpush.msra.mxu0 %v889
        %v891 = vand.u32 %v343, 4294901760
        %v892 = vsub.f32 %v343, %v891
        %v893 = vand.u32 %v892, 4294901760
        %894 = vmatpush.msra.mxu0 %v893
        %v895 = vand.u32 %v342, 4294901760
        %v896 = vsub.f32 %v342, %v895
        %v897 = vand.u32 %v896, 4294901760
        %898 = vmatpush.msra.mxu0 %v897
        %v899 = vand.u32 %v341, 4294901760
        %v900 = vsub.f32 %v341, %v899
        %v901 = vand.u32 %v900, 4294901760
        %902 = vmatpush.msra.mxu0 %v901
        %v903 = vand.u32 %v340, 4294901760
        %v904 = vsub.f32 %v340, %v903
        %v905 = vand.u32 %v904, 4294901760
        %906 = vmatpush.msra.mxu0 %v905
        %v907 = vand.u32 %v339, 4294901760
        %v908 = vsub.f32 %v339, %v907
        %v909 = vand.u32 %v908, 4294901760
        %910 = vmatpush.msra.mxu0 %v909
        %v911 = vand.u32 %v338, 4294901760
        %v912 = vsub.f32 %v338, %v911
        %v913 = vand.u32 %v912, 4294901760
        %914 = vmatpush.msra.mxu0 %v913
        %v915 = vand.u32 %v337, 4294901760
        %v916 = vsub.f32 %v337, %v915
        %v917 = vand.u32 %v916, 4294901760
        %918 = vmatpush.msra.mxu0 %v917
        %v919 = vand.u32 %v336, 4294901760
        %v920 = vsub.f32 %v336, %v919
        %v921 = vand.u32 %v920, 4294901760
        %922 = vmatpush.msra.mxu0 %v921
        %v923 = vand.u32 %v335, 4294901760
        %v924 = vsub.f32 %v335, %v923
        %v925 = vand.u32 %v924, 4294901760
        %926 = vmatpush.msra.mxu0 %v925
        %v927 = vand.u32 %v334, 4294901760
        %v928 = vsub.f32 %v334, %v927
        %v929 = vand.u32 %v928, 4294901760
        %930 = vmatpush.msra.mxu0 %v929
        %v931 = vand.u32 %v333, 4294901760
        %v932 = vsub.f32 %v333, %v931
        %v933 = vand.u32 %v932, 4294901760
        %934 = vmatpush.msra.mxu0 %v933
        %v935 = vand.u32 %v332, 4294901760
        %v936 = vsub.f32 %v332, %v935
        %v937 = vand.u32 %v936, 4294901760
        %938 = vmatpush.msra.mxu0 %v937
        %v939 = vand.u32 %v331, 4294901760
        %v940 = vsub.f32 %v331, %v939
        %v941 = vand.u32 %v940, 4294901760
        %942 = vmatpush.msra.mxu0 %v941
        %v943 = vand.u32 %v666, 4294901760
        %944 = vmatmul.f32.gmra.mxu0 %v943
        %v945 = vpop.f32.mrf.mxu0
        %v946 = vadd.f32 %v883, %v945
        %947 = vdwg.mxu0
        %948 = vmatpush.msra.mxu0 0.0
        %949 = vmatpush.msra.mxu0 0.0
        %v950 = vand.u32 %v344, 4294901760
        %951 = vmatpush.msra.mxu0 %v950
        %v952 = vand.u32 %v343, 4294901760
        %953 = vmatpush.msra.mxu0 %v952
        %v954 = vand.u32 %v342, 4294901760
        %955 = vmatpush.msra.mxu0 %v954
        %v956 = vand.u32 %v341, 4294901760
        %957 = vmatpush.msra.mxu0 %v956
        %v958 = vand.u32 %v340, 4294901760
        %959 = vmatpush.msra.mxu0 %v958
        %v960 = vand.u32 %v339, 4294901760
        %961 = vmatpush.msra.mxu0 %v960
        %v962 = vand.u32 %v338, 4294901760
        %963 = vmatpush.msra.mxu0 %v962
        %v964 = vand.u32 %v337, 4294901760
        %965 = vmatpush.msra.mxu0 %v964
        %v966 = vand.u32 %v336, 4294901760
        %967 = vmatpush.msra.mxu0 %v966
        %v968 = vand.u32 %v335, 4294901760
        %969 = vmatpush.msra.mxu0 %v968
        %v970 = vand.u32 %v334, 4294901760
        %971 = vmatpush.msra.mxu0 %v970
        %v972 = vand.u32 %v333, 4294901760
        %973 = vmatpush.msra.mxu0 %v972
        %v974 = vand.u32 %v332, 4294901760
        %975 = vmatpush.msra.mxu0 %v974
        %v976 = vand.u32 %v331, 4294901760
        %977 = vmatpush.msra.mxu0 %v976
        %v978 = vand.u32 %v666, 4294901760
        %979 = vmatmul.f32.gmra.mxu0 %v978
        %v980 = vpop.f32.mrf.mxu0
        %v981 = vadd.f32 %v946, %v980
        %982 = vdwg.mxu0
        %v983 = vmul.f32 %v662, %v662
        %v984 = vsub.f32 %v981, %v983
        %v985 = vsub.f32 %v330, %v662
        %v986 = vadd.f32 %v984, 1e-05
        %v987 = vrsqrt.pop %v986
        %v988 = vmul.f32 %v987, %v986
        %v989 = vmul.f32 %v988, %v987
        %v990 = vmul.f32 0.5, %v989
        %v991 = vsub.f32 1.5, %v990
        %v992 = vmul.f32 %v987, %v991
        %vm993 = vweird.f32 %v986
        %vm994 = vweird.f32 %v987
        %vm995 = vmor %vm993, %vm994
        %v996 = vsel %vm995, %v987, %v992
        %v997 = vmul.f32 %v985, %v996
        %v998 = vld [vmem:[#allocation8] sm:$0xff]
        %v999 = vld [vmem:[#allocation8 + $0x8] sm:$0xff]
        %v1000 = vld [vmem:[#allocation8 + $0x10] sm:$0xff]
        %v1001 = vld [vmem:[#allocation8 + $0x18] sm:$0xff]
        %v1002 = vld [vmem:[#allocation8 + $0x20] sm:$0xff]
        %v1003 = vld [vmem:[#allocation8 + $0x28] sm:$0xff]
        %v1004 = vld [vmem:[#allocation8 + $0x30] sm:$0xff]
        %v1005 = vld [vmem:[#allocation8 + $0x38] sm:$0xff]
        %v1006 = vld [vmem:[#allocation8 + $0x40] sm:$0xff]
        %v1007 = vld [vmem:[#allocation8 + $0x48] sm:$0xff]
        %v1008 = vld [vmem:[#allocation8 + $0x50] sm:$0xff]
        %v1009 = vld [vmem:[#allocation8 + $0x58] sm:$0xff]
        %v1010 = vld [vmem:[#allocation8 + $0x60] sm:$0xff]
        %v1011 = vld [vmem:[#allocation8 + $0x68] sm:$0xff]
        %v1013 = vsel %vm345, %v997, 0
        %1015 = vmatpush.msra.mxu0 0.0
        %1016 = vmatpush.msra.mxu0 0.0
        %v1017 = vand.u32 %v1011, 4294901760
        %1018 = vmatpush.msra.mxu0 %v1017
        %v1019 = vand.u32 %v1010, 4294901760
        %1020 = vmatpush.msra.mxu0 %v1019
        %v1021 = vand.u32 %v1009, 4294901760
        %1022 = vmatpush.msra.mxu0 %v1021
        %v1023 = vand.u32 %v1008, 4294901760
        %1024 = vmatpush.msra.mxu0 %v1023
        %v1025 = vand.u32 %v1007, 4294901760
        %1026 = vmatpush.msra.mxu0 %v1025
        %v1027 = vand.u32 %v1006, 4294901760
        %1028 = vmatpush.msra.mxu0 %v1027
        %v1029 = vand.u32 %v1005, 4294901760
        %1030 = vmatpush.msra.mxu0 %v1029
        %v1031 = vand.u32 %v1004, 4294901760
        %1032 = vmatpush.msra.mxu0 %v1031
        %v1033 = vand.u32 %v1003, 4294901760
        %1034 = vmatpush.msra.mxu0 %v1033
        %v1035 = vand.u32 %v1002, 4294901760
        %1036 = vmatpush.msra.mxu0 %v1035
        %v1037 = vand.u32 %v1001, 4294901760
        %1038 = vmatpush.msra.mxu0 %v1037
        %v1039 = vand.u32 %v1000, 4294901760
        %1040 = vmatpush.msra.mxu0 %v1039
        %v1041 = vand.u32 %v999, 4294901760
        %1042 = vmatpush.msra.mxu0 %v1041
        %v1043 = vand.u32 %v998, 4294901760
        %1044 = vmatpush.msra.mxu0 %v1043
        %v1045 = vand.u32 %v1013, 4294901760
        %v1046 = vsub.f32 %v1013, %v1045
        %v1047 = vand.u32 %v1046, 4294901760
        %v1048 = vsub.f32 %v1046, %v1047
        %v1049 = vand.u32 %v1048, 4294901760
        %1050 = vmatmul.f32.gmra.mxu0 %v1049
        %v1051 = vpop.f32.mrf.mxu0
        %v1052 = vadd.f32 0.0, %v1051
        %1053 = vdwg.mxu0
        %1054 = vmatpush.msra.mxu0 0.0
        %1055 = vmatpush.msra.mxu0 0.0
        %v1056 = vand.u32 %v1011, 4294901760
        %v1057 = vsub.f32 %v1011, %v1056
        %v1058 = vand.u32 %v1057, 4294901760
        %v1059 = vsub.f32 %v1057, %v1058
        %v1060 = vand.u32 %v1059, 4294901760
        %1061 = vmatpush.msra.mxu0 %v1060
        %v1062 = vand.u32 %v1010, 4294901760
        %v1063 = vsub.f32 %v1010, %v1062
        %v1064 = vand.u32 %v1063, 4294901760
        %v1065 = vsub.f32 %v1063, %v1064
        %v1066 = vand.u32 %v1065, 4294901760
        %1067 = vmatpush.msra.mxu0 %v1066
        %v1068 = vand.u32 %v1009, 4294901760
        %v1069 = vsub.f32 %v1009, %v1068
        %v1070 = vand.u32 %v1069, 4294901760
        %v1071 = vsub.f32 %v1069, %v1070
        %v1072 = vand.u32 %v1071, 4294901760
        %1073 = vmatpush.msra.mxu0 %v1072
        %v1074 = vand.u32 %v1008, 4294901760
        %v1075 = vsub.f32 %v1008, %v1074
        %v1076 = vand.u32 %v1075, 4294901760
        %v1077 = vsub.f32 %v1075, %v1076
        %v1078 = vand.u32 %v1077, 4294901760
        %1079 = vmatpush.msra.mxu0 %v1078
        %v1080 = vand.u32 %v1007, 4294901760
        %v1081 = vsub.f32 %v1007, %v1080
        %v1082 = vand.u32 %v1081, 4294901760
        %v1083 = vsub.f32 %v1081, %v1082
        %v1084 = vand.u32 %v1083, 4294901760
        %1085 = vmatpush.msra.mxu0 %v1084
        %v1086 = vand.u32 %v1006, 4294901760
        %v1087 = vsub.f32 %v1006, %v1086
        %v1088 = vand.u32 %v1087, 4294901760
        %v1089 = vsub.f32 %v1087, %v1088
        %v1090 = vand.u32 %v1089, 4294901760
        %1091 = vmatpush.msra.mxu0 %v1090
        %v1092 = vand.u32 %v1005, 4294901760
        %v1093 = vsub.f32 %v1005, %v1092
        %v1094 = vand.u32 %v1093, 4294901760
        %v1095 = vsub.f32 %v1093, %v1094
        %v1096 = vand.u32 %v1095, 4294901760
        %1097 = vmatpush.msra.mxu0 %v1096
        %v1098 = vand.u32 %v1004, 4294901760
        %v1099 = vsub.f32 %v1004, %v1098
        %v1100 = vand.u32 %v1099, 4294901760
        %v1101 = vsub.f32 %v1099, %v1100
        %v1102 = vand.u32 %v1101, 4294901760
        %1103 = vmatpush.msra.mxu0 %v1102
        %v1104 = vand.u32 %v1003, 4294901760
        %v1105 = vsub.f32 %v1003, %v1104
        %v1106 = vand.u32 %v1105, 4294901760
        %v1107 = vsub.f32 %v1105, %v1106
        %v1108 = vand.u32 %v1107, 4294901760
        %1109 = vmatpush.msra.mxu0 %v1108
        %v1110 = vand.u32 %v1002, 4294901760
        %v1111 = vsub.f32 %v1002, %v1110
        %v1112 = vand.u32 %v1111, 4294901760
        %v1113 = vsub.f32 %v1111, %v1112
        %v1114 = vand.u32 %v1113, 4294901760
        %1115 = vmatpush.msra.mxu0 %v1114
        %v1116 = vand.u32 %v1001, 4294901760
        %v1117 = vsub.f32 %v1001, %v1116
        %v1118 = vand.u32 %v1117, 4294901760
        %v1119 = vsub.f32 %v1117, %v1118
        %v1120 = vand.u32 %v1119, 4294901760
        %1121 = vmatpush.msra.mxu0 %v1120
        %v1122 = vand.u32 %v1000, 4294901760
        %v1123 = vsub.f32 %v1000, %v1122
        %v1124 = vand.u32 %v1123, 4294901760
        %v1125 = vsub.f32 %v1123, %v1124
        %v1126 = vand.u32 %v1125, 4294901760
        %1127 = vmatpush.msra.mxu0 %v1126
        %v1128 = vand.u32 %v999, 4294901760
        %v1129 = vsub.f32 %v999, %v1128
        %v1130 = vand.u32 %v1129, 4294901760
        %v1131 = vsub.f32 %v1129, %v1130
        %v1132 = vand.u32 %v1131, 4294901760
        %1133 = vmatpush.msra.mxu0 %v1132
        %v1134 = vand.u32 %v998, 4294901760
        %v1135 = vsub.f32 %v998, %v1134
        %v1136 = vand.u32 %v1135, 4294901760
        %v1137 = vsub.f32 %v1135, %v1136
        %v1138 = vand.u32 %v1137, 4294901760
        %1139 = vmatpush.msra.mxu0 %v1138
        %v1140 = vand.u32 %v1013, 4294901760
        %1141 = vmatmul.f32.gmra.mxu0 %v1140
        %v1142 = vpop.f32.mrf.mxu0
        %v1143 = vadd.f32 %v1052, %v1142
        %1144 = vdwg.mxu0
        %1145 = vmatpush.msra.mxu0 0.0
        %1146 = vmatpush.msra.mxu0 0.0
        %v1147 = vand.u32 %v1011, 4294901760
        %v1148 = vsub.f32 %v1011, %v1147
        %1149 = vmatpush.msra.mxu0 %v1148
        %v1150 = vand.u32 %v1010, 4294901760
        %v1151 = vsub.f32 %v1010, %v1150
        %1152 = vmatpush.msra.mxu0 %v1151
        %v1153 = vand.u32 %v1009, 4294901760
        %v1154 = vsub.f32 %v1009, %v1153
        %1155 = vmatpush.msra.mxu0 %v1154
        %v1156 = vand.u32 %v1008, 4294901760
        %v1157 = vsub.f32 %v1008, %v1156
        %1158 = vmatpush.msra.mxu0 %v1157
        %v1159 = vand.u32 %v1007, 4294901760
        %v1160 = vsub.f32 %v1007, %v1159
        %1161 = vmatpush.msra.mxu0 %v1160
        %v1162 = vand.u32 %v1006, 4294901760
        %v1163 = vsub.f32 %v1006, %v1162
        %1164 = vmatpush.msra.mxu0 %v1163
        %v1165 = vand.u32 %v1005, 4294901760
        %v1166 = vsub.f32 %v1005, %v1165
        %1167 = vmatpush.msra.mxu0 %v1166
        %v1168 = vand.u32 %v1004, 4294901760
        %v1169 = vsub.f32 %v1004, %v1168
        %1170 = vmatpush.msra.mxu0 %v1169
        %v1171 = vand.u32 %v1003, 4294901760
        %v1172 = vsub.f32 %v1003, %v1171
        %1173 = vmatpush.msra.mxu0 %v1172
        %v1174 = vand.u32 %v1002, 4294901760
        %v1175 = vsub.f32 %v1002, %v1174
        %1176 = vmatpush.msra.mxu0 %v1175
        %v1177 = vand.u32 %v1001, 4294901760
        %v1178 = vsub.f32 %v1001, %v1177
        %1179 = vmatpush.msra.mxu0 %v1178
        %v1180 = vand.u32 %v1000, 4294901760
        %v1181 = vsub.f32 %v1000, %v1180
        %1182 = vmatpush.msra.mxu0 %v1181
        %v1183 = vand.u32 %v999, 4294901760
        %v1184 = vsub.f32 %v999, %v1183
        %1185 = vmatpush.msra.mxu0 %v1184
        %v1186 = vand.u32 %v998, 4294901760
        %v1187 = vsub.f32 %v998, %v1186
        %1188 = vmatpush.msra.mxu0 %v1187
        %v1189 = vand.u32 %v1013, 4294901760
        %v1190 = vsub.f32 %v1013, %v1189
        %1191 = vmatmul.f32.gmra.mxu0 %v1190
        %v1192 = vpop.f32.mrf.mxu0
        %v1193 = vadd.f32 %v1143, %v1192
        %1194 = vdwg.mxu0
        %1195 = vmatpush.msra.mxu0 0.0
        %1196 = vmatpush.msra.mxu0 0.0
        %v1197 = vand.u32 %v1011, 4294901760
        %1198 = vmatpush.msra.mxu0 %v1197
        %v1199 = vand.u32 %v1010, 4294901760
        %1200 = vmatpush.msra.mxu0 %v1199
        %v1201 = vand.u32 %v1009, 4294901760
        %1202 = vmatpush.msra.mxu0 %v1201
        %v1203 = vand.u32 %v1008, 4294901760
        %1204 = vmatpush.msra.mxu0 %v1203
        %v1205 = vand.u32 %v1007, 4294901760
        %1206 = vmatpush.msra.mxu0 %v1205
        %v1207 = vand.u32 %v1006, 4294901760
        %1208 = vmatpush.msra.mxu0 %v1207
        %v1209 = vand.u32 %v1005, 4294901760
        %1210 = vmatpush.msra.mxu0 %v1209
        %v1211 = vand.u32 %v1004, 4294901760
        %1212 = vmatpush.msra.mxu0 %v1211
        %v1213 = vand.u32 %v1003, 4294901760
        %1214 = vmatpush.msra.mxu0 %v1213
        %v1215 = vand.u32 %v1002, 4294901760
        %1216 = vmatpush.msra.mxu0 %v1215
        %v1217 = vand.u32 %v1001, 4294901760
        %1218 = vmatpush.msra.mxu0 %v1217
        %v1219 = vand.u32 %v1000, 4294901760
        %1220 = vmatpush.msra.mxu0 %v1219
        %v1221 = vand.u32 %v999, 4294901760
        %1222 = vmatpush.msra.mxu0 %v1221
        %v1223 = vand.u32 %v998, 4294901760
        %1224 = vmatpush.msra.mxu0 %v1223
        %v1225 = vand.u32 %v1013, 4294901760
        %v1226 = vsub.f32 %v1013, %v1225
        %v1227 = vand.u32 %v1226, 4294901760
        %1228 = vmatmul.f32.gmra.mxu0 %v1227
        %v1229 = vpop.f32.mrf.mxu0
        %v1230 = vadd.f32 %v1193, %v1229
        %1231 = vdwg.mxu0
        %1232 = vmatpush.msra.mxu0 0.0
        %1233 = vmatpush.msra.mxu0 0.0
        %v1234 = vand.u32 %v1011, 4294901760
        %v1235 = vsub.f32 %v1011, %v1234
        %v1236 = vand.u32 %v1235, 4294901760
        %1237 = vmatpush.msra.mxu0 %v1236
        %v1238 = vand.u32 %v1010, 4294901760
        %v1239 = vsub.f32 %v1010, %v1238
        %v1240 = vand.u32 %v1239, 4294901760
        %1241 = vmatpush.msra.mxu0 %v1240
        %v1242 = vand.u32 %v1009, 4294901760
        %v1243 = vsub.f32 %v1009, %v1242
        %v1244 = vand.u32 %v1243, 4294901760
        %1245 = vmatpush.msra.mxu0 %v1244
        %v1246 = vand.u32 %v1008, 4294901760
        %v1247 = vsub.f32 %v1008, %v1246
        %v1248 = vand.u32 %v1247, 4294901760
        %1249 = vmatpush.msra.mxu0 %v1248
        %v1250 = vand.u32 %v1007, 4294901760
        %v1251 = vsub.f32 %v1007, %v1250
        %v1252 = vand.u32 %v1251, 4294901760
        %1253 = vmatpush.msra.mxu0 %v1252
        %v1254 = vand.u32 %v1006, 4294901760
        %v1255 = vsub.f32 %v1006, %v1254
        %v1256 = vand.u32 %v1255, 4294901760
        %1257 = vmatpush.msra.mxu0 %v1256
        %v1258 = vand.u32 %v1005, 4294901760
        %v1259 = vsub.f32 %v1005, %v1258
        %v1260 = vand.u32 %v1259, 4294901760
        %1261 = vmatpush.msra.mxu0 %v1260
        %v1262 = vand.u32 %v1004, 4294901760
        %v1263 = vsub.f32 %v1004, %v1262
        %v1264 = vand.u32 %v1263, 4294901760
        %1265 = vmatpush.msra.mxu0 %v1264
        %v1266 = vand.u32 %v1003, 4294901760
        %v1267 = vsub.f32 %v1003, %v1266
        %v1268 = vand.u32 %v1267, 4294901760
        %1269 = vmatpush.msra.mxu0 %v1268
        %v1270 = vand.u32 %v1002, 4294901760
        %v1271 = vsub.f32 %v1002, %v1270
        %v1272 = vand.u32 %v1271, 4294901760
        %1273 = vmatpush.msra.mxu0 %v1272
        %v1274 = vand.u32 %v1001, 4294901760
        %v1275 = vsub.f32 %v1001, %v1274
        %v1276 = vand.u32 %v1275, 4294901760
        %1277 = vmatpush.msra.mxu0 %v1276
        %v1278 = vand.u32 %v1000, 4294901760
        %v1279 = vsub.f32 %v1000, %v1278
        %v1280 = vand.u32 %v1279, 4294901760
        %1281 = vmatpush.msra.mxu0 %v1280
        %v1282 = vand.u32 %v999, 4294901760
        %v1283 = vsub.f32 %v999, %v1282
        %v1284 = vand.u32 %v1283, 4294901760
        %1285 = vmatpush.msra.mxu0 %v1284
        %v1286 = vand.u32 %v998, 4294901760
        %v1287 = vsub.f32 %v998, %v1286
        %v1288 = vand.u32 %v1287, 4294901760
        %1289 = vmatpush.msra.mxu0 %v1288
        %v1290 = vand.u32 %v1013, 4294901760
        %1291 = vmatmul.f32.gmra.mxu0 %v1290
        %v1292 = vpop.f32.mrf.mxu0
        %v1293 = vadd.f32 %v1230, %v1292
        %1294 = vdwg.mxu0
        %1295 = vmatpush.msra.mxu0 0.0
        %1296 = vmatpush.msra.mxu0 0.0
        %v1297 = vand.u32 %v1011, 4294901760
        %1298 = vmatpush.msra.mxu0 %v1297
        %v1299 = vand.u32 %v1010, 4294901760
        %1300 = vmatpush.msra.mxu0 %v1299
        %v1301 = vand.u32 %v1009, 4294901760
        %1302 = vmatpush.msra.mxu0 %v1301
        %v1303 = vand.u32 %v1008, 4294901760
        %1304 = vmatpush.msra.mxu0 %v1303
        %v1305 = vand.u32 %v1007, 4294901760
        %1306 = vmatpush.msra.mxu0 %v1305
        %v1307 = vand.u32 %v1006, 4294901760
        %1308 = vmatpush.msra.mxu0 %v1307
        %v1309 = vand.u32 %v1005, 4294901760
        %1310 = vmatpush.msra.mxu0 %v1309
        %v1311 = vand.u32 %v1004, 4294901760
        %1312 = vmatpush.msra.mxu0 %v1311
        %v1313 = vand.u32 %v1003, 4294901760
        %1314 = vmatpush.msra.mxu0 %v1313
        %v1315 = vand.u32 %v1002, 4294901760
        %1316 = vmatpush.msra.mxu0 %v1315
        %v1317 = vand.u32 %v1001, 4294901760
        %1318 = vmatpush.msra.mxu0 %v1317
        %v1319 = vand.u32 %v1000, 4294901760
        %1320 = vmatpush.msra.mxu0 %v1319
        %v1321 = vand.u32 %v999, 4294901760
        %1322 = vmatpush.msra.mxu0 %v1321
        %v1323 = vand.u32 %v998, 4294901760
        %1324 = vmatpush.msra.mxu0 %v1323
        %v1325 = vand.u32 %v1013, 4294901760
        %1326 = vmatmul.f32.gmra.mxu0 %v1325
        %v1327 = vpop.f32.mrf.mxu0
        %v1328 = vadd.f32 %v1293, %v1327
        %1329 = vdwg.mxu0
        %v1330 = vmax.f32 %v1328, 0.0
        %1331 = vadd.xlane.f32.xlu0 %v1330
        %v1332 = vpop.xlane.xlu0 %1331
        %v1333 = vrcp.pop 128.0
        %v1334 = vmul.f32 128.0, %v1333
        %v1335 = vsub.f32 1.0, %v1334
        %v1336 = vmul.f32 %v1333, %v1335
        %v1337 = vadd.f32 %v1333, %v1336
        %vm1338 = vweird.f32 %v1333
        %v1339 = vsel %vm1338, %v1333, %v1337
        %v1340 = vmul.f32 %v1332, %v1339
        %v1341 = vmul.f32 %v1330, %v1330
        %1342 = vadd.xlane.f32.xlu0 %v1341
        %v1343 = vpop.xlane.xlu0 %1342
        %v1344 = vmul.f32 %v1343, %v1339
        %v1345 = vmul.f32 %v1340, %v1340
        %v1346 = vsub.f32 %v1344, %v1345
        %v1347 = vsub.f32 %v1330, %v1340
        %v1348 = vadd.f32 %v1346, 1e-05
        %v1349 = vrsqrt.pop %v1348
        %v1350 = vmul.f32 %v1349, %v1348
        %v1351 = vmul.f32 %v1350, %v1349
        %v1352 = vmul.f32 0.5, %v1351
        %v1353 = vsub.f32 1.5, %v1352
        %v1354 = vmul.f32 %v1349, %v1353
        %vm1355 = vweird.f32 %v1348
        %vm1356 = vweird.f32 %v1349
        %vm1357 = vmor %vm1355, %vm1356
        %v1358 = vsel %vm1357, %v1349, %v1354
        %v1359 = vmul.f32 %v1347, %v1358
        %v1360 = vld [vmem:[#allocation10] sm:$0xff]
        %v1361 = vld [vmem:[#allocation10 + $0x8] sm:$0xff]
        %v1362 = vld [vmem:[#allocation10 + $0x10] sm:$0xff]
        %v1363 = vld [vmem:[#allocation10 + $0x18] sm:$0xff]
        %v1364 = vld [vmem:[#allocation10 + $0x20] sm:$0xff]
        %v1365 = vld [vmem:[#allocation10 + $0x28] sm:$0xff]
        %v1366 = vld [vmem:[#allocation10 + $0x30] sm:$0xff]
        %v1367 = vld [vmem:[#allocation10 + $0x38] sm:$0xff]
        %v1368 = vld [vmem:[#allocation10 + $0x40] sm:$0xff]
        %v1369 = vld [vmem:[#allocation10 + $0x48] sm:$0xff]
        %v1370 = vld [vmem:[#allocation10 + $0x50] sm:$0xff]
        %v1371 = vld [vmem:[#allocation10 + $0x58] sm:$0xff]
        %v1372 = vld [vmem:[#allocation10 + $0x60] sm:$0xff]
        %v1373 = vld [vmem:[#allocation10 + $0x68] sm:$0xff]
        %v1374 = vld [vmem:[#allocation10 + $0x70] sm:$0xff]
        %v1375 = vld [vmem:[#allocation10 + $0x78] sm:$0xff]
        %v1376 = vand.u32 %v1375, 4294901760
        %1377 = vmatpush.msra.mxu0 %v1376
        %v1378 = vand.u32 %v1374, 4294901760
        %1379 = vmatpush.msra.mxu0 %v1378
        %v1380 = vand.u32 %v1373, 4294901760
        %1381 = vmatpush.msra.mxu0 %v1380
        %v1382 = vand.u32 %v1372, 4294901760
        %1383 = vmatpush.msra.mxu0 %v1382
        %v1384 = vand.u32 %v1371, 4294901760
        %1385 = vmatpush.msra.mxu0 %v1384
        %v1386 = vand.u32 %v1370, 4294901760
        %1387 = vmatpush.msra.mxu0 %v1386
        %v1388 = vand.u32 %v1369, 4294901760
        %1389 = vmatpush.msra.mxu0 %v1388
        %v1390 = vand.u32 %v1368, 4294901760
        %1391 = vmatpush.msra.mxu0 %v1390
        %v1392 = vand.u32 %v1367, 4294901760
        %1393 = vmatpush.msra.mxu0 %v1392
        %v1394 = vand.u32 %v1366, 4294901760
        %1395 = vmatpush.msra.mxu0 %v1394
        %v1396 = vand.u32 %v1365, 4294901760
        %1397 = vmatpush.msra.mxu0 %v1396
        %v1398 = vand.u32 %v1364, 4294901760
        %1399 = vmatpush.msra.mxu0 %v1398
        %v1400 = vand.u32 %v1363, 4294901760
        %1401 = vmatpush.msra.mxu0 %v1400
        %v1402 = vand.u32 %v1362, 4294901760
        %1403 = vmatpush.msra.mxu0 %v1402
        %v1404 = vand.u32 %v1361, 4294901760
        %1405 = vmatpush.msra.mxu0 %v1404
        %v1406 = vand.u32 %v1360, 4294901760
        %1407 = vmatpush.msra.mxu0 %v1406
        %v1408 = vand.u32 %v1359, 4294901760
        %v1409 = vsub.f32 %v1359, %v1408
        %v1410 = vand.u32 %v1409, 4294901760
        %v1411 = vsub.f32 %v1409, %v1410
        %v1412 = vand.u32 %v1411, 4294901760
        %1413 = vmatmul.f32.gmra.mxu0 %v1412
        %v1414 = vpop.f32.mrf.mxu0
        %v1415 = vadd.f32 0.0, %v1414
        %1416 = vdwg.mxu0
        %v1417 = vand.u32 %v1375, 4294901760
        %v1418 = vsub.f32 %v1375, %v1417
        %v1419 = vand.u32 %v1418, 4294901760
        %v1420 = vsub.f32 %v1418, %v1419
        %v1421 = vand.u32 %v1420, 4294901760
        %1422 = vmatpush.msra.mxu0 %v1421
        %v1423 = vand.u32 %v1374, 4294901760
        %v1424 = vsub.f32 %v1374, %v1423
        %v1425 = vand.u32 %v1424, 4294901760
        %v1426 = vsub.f32 %v1424, %v1425
        %v1427 = vand.u32 %v1426, 4294901760
        %1428 = vmatpush.msra.mxu0 %v1427
        %v1429 = vand.u32 %v1373, 4294901760
        %v1430 = vsub.f32 %v1373, %v1429
        %v1431 = vand.u32 %v1430, 4294901760
        %v1432 = vsub.f32 %v1430, %v1431
        %v1433 = vand.u32 %v1432, 4294901760
        %1434 = vmatpush.msra.mxu0 %v1433
        %v1435 = vand.u32 %v1372, 4294901760
        %v1436 = vsub.f32 %v1372, %v1435
        %v1437 = vand.u32 %v1436, 4294901760
        %v1438 = vsub.f32 %v1436, %v1437
        %v1439 = vand.u32 %v1438, 4294901760
        %1440 = vmatpush.msra.mxu0 %v1439
        %v1441 = vand.u32 %v1371, 4294901760
        %v1442 = vsub.f32 %v1371, %v1441
        %v1443 = vand.u32 %v1442, 4294901760
        %v1444 = vsub.f32 %v1442, %v1443
        %v1445 = vand.u32 %v1444, 4294901760
        %1446 = vmatpush.msra.mxu0 %v1445
        %v1447 = vand.u32 %v1370, 4294901760
        %v1448 = vsub.f32 %v1370, %v1447
        %v1449 = vand.u32 %v1448, 4294901760
        %v1450 = vsub.f32 %v1448, %v1449
        %v1451 = vand.u32 %v1450, 4294901760
        %1452 = vmatpush.msra.mxu0 %v1451
        %v1453 = vand.u32 %v1369, 4294901760
        %v1454 = vsub.f32 %v1369, %v1453
        %v1455 = vand.u32 %v1454, 4294901760
        %v1456 = vsub.f32 %v1454, %v1455
        %v1457 = vand.u32 %v1456, 4294901760
        %1458 = vmatpush.msra.mxu0 %v1457
        %v1459 = vand.u32 %v1368, 4294901760
        %v1460 = vsub.f32 %v1368, %v1459
        %v1461 = vand.u32 %v1460, 4294901760
        %v1462 = vsub.f32 %v1460, %v1461
        %v1463 = vand.u32 %v1462, 4294901760
        %1464 = vmatpush.msra.mxu0 %v1463
        %v1465 = vand.u32 %v1367, 4294901760
        %v1466 = vsub.f32 %v1367, %v1465
        %v1467 = vand.u32 %v1466, 4294901760
        %v1468 = vsub.f32 %v1466, %v1467
        %v1469 = vand.u32 %v1468, 4294901760
        %1470 = vmatpush.msra.mxu0 %v1469
        %v1471 = vand.u32 %v1366, 4294901760
        %v1472 = vsub.f32 %v1366, %v1471
        %v1473 = vand.u32 %v1472, 4294901760
        %v1474 = vsub.f32 %v1472, %v1473
        %v1475 = vand.u32 %v1474, 4294901760
        %1476 = vmatpush.msra.mxu0 %v1475
        %v1477 = vand.u32 %v1365, 4294901760
        %v1478 = vsub.f32 %v1365, %v1477
        %v1479 = vand.u32 %v1478, 4294901760
        %v1480 = vsub.f32 %v1478, %v1479
        %v1481 = vand.u32 %v1480, 4294901760
        %1482 = vmatpush.msra.mxu0 %v1481
        %v1483 = vand.u32 %v1364, 4294901760
        %v1484 = vsub.f32 %v1364, %v1483
        %v1485 = vand.u32 %v1484, 4294901760
        %v1486 = vsub.f32 %v1484, %v1485
        %v1487 = vand.u32 %v1486, 4294901760
        %1488 = vmatpush.msra.mxu0 %v1487
        %v1489 = vand.u32 %v1363, 4294901760
        %v1490 = vsub.f32 %v1363, %v1489
        %v1491 = vand.u32 %v1490, 4294901760
        %v1492 = vsub.f32 %v1490, %v1491
        %v1493 = vand.u32 %v1492, 4294901760
        %1494 = vmatpush.msra.mxu0 %v1493
        %v1495 = vand.u32 %v1362, 4294901760
        %v1496 = vsub.f32 %v1362, %v1495
        %v1497 = vand.u32 %v1496, 4294901760
        %v1498 = vsub.f32 %v1496, %v1497
        %v1499 = vand.u32 %v1498, 4294901760
        %1500 = vmatpush.msra.mxu0 %v1499
        %v1501 = vand.u32 %v1361, 4294901760
        %v1502 = vsub.f32 %v1361, %v1501
        %v1503 = vand.u32 %v1502, 4294901760
        %v1504 = vsub.f32 %v1502, %v1503
        %v1505 = vand.u32 %v1504, 4294901760
        %1506 = vmatpush.msra.mxu0 %v1505
        %v1507 = vand.u32 %v1360, 4294901760
        %v1508 = vsub.f32 %v1360, %v1507
        %v1509 = vand.u32 %v1508, 4294901760
        %v1510 = vsub.f32 %v1508, %v1509
        %v1511 = vand.u32 %v1510, 4294901760
        %1512 = vmatpush.msra.mxu0 %v1511
        %v1513 = vand.u32 %v1359, 4294901760
        %1514 = vmatmul.f32.gmra.mxu0 %v1513
        %v1515 = vpop.f32.mrf.mxu0
        %v1516 = vadd.f32 %v1415, %v1515
        %1517 = vdwg.mxu0
        %v1518 = vand.u32 %v1375, 4294901760
        %v1519 = vsub.f32 %v1375, %v1518
        %1520 = vmatpush.msra.mxu0 %v1519
        %v1521 = vand.u32 %v1374, 4294901760
        %v1522 = vsub.f32 %v1374, %v1521
        %1523 = vmatpush.msra.mxu0 %v1522
        %v1524 = vand.u32 %v1373, 4294901760
        %v1525 = vsub.f32 %v1373, %v1524
        %1526 = vmatpush.msra.mxu0 %v1525
        %v1527 = vand.u32 %v1372, 4294901760
        %v1528 = vsub.f32 %v1372, %v1527
        %1529 = vmatpush.msra.mxu0 %v1528
        %v1530 = vand.u32 %v1371, 4294901760
        %v1531 = vsub.f32 %v1371, %v1530
        %1532 = vmatpush.msra.mxu0 %v1531
        %v1533 = vand.u32 %v1370, 4294901760
        %v1534 = vsub.f32 %v1370, %v1533
        %1535 = vmatpush.msra.mxu0 %v1534
        %v1536 = vand.u32 %v1369, 4294901760
        %v1537 = vsub.f32 %v1369, %v1536
        %1538 = vmatpush.msra.mxu0 %v1537
        %v1539 = vand.u32 %v1368, 4294901760
        %v1540 = vsub.f32 %v1368, %v1539
        %1541 = vmatpush.msra.mxu0 %v1540
        %v1542 = vand.u32 %v1367, 4294901760
        %v1543 = vsub.f32 %v1367, %v1542
        %1544 = vmatpush.msra.mxu0 %v1543
        %v1545 = vand.u32 %v1366, 4294901760
        %v1546 = vsub.f32 %v1366, %v1545
        %1547 = vmatpush.msra.mxu0 %v1546
        %v1548 = vand.u32 %v1365, 4294901760
        %v1549 = vsub.f32 %v1365, %v1548
        %1550 = vmatpush.msra.mxu0 %v1549
        %v1551 = vand.u32 %v1364, 4294901760
        %v1552 = vsub.f32 %v1364, %v1551
        %1553 = vmatpush.msra.mxu0 %v1552
        %v1554 = vand.u32 %v1363, 4294901760
        %v1555 = vsub.f32 %v1363, %v1554
        %1556 = vmatpush.msra.mxu0 %v1555
        %v1557 = vand.u32 %v1362, 4294901760
        %v1558 = vsub.f32 %v1362, %v1557
        %1559 = vmatpush.msra.mxu0 %v1558
        %v1560 = vand.u32 %v1361, 4294901760
        %v1561 = vsub.f32 %v1361, %v1560
        %1562 = vmatpush.msra.mxu0 %v1561
        %v1563 = vand.u32 %v1360, 4294901760
        %v1564 = vsub.f32 %v1360, %v1563
        %1565 = vmatpush.msra.mxu0 %v1564
        %v1566 = vand.u32 %v1359, 4294901760
        %v1567 = vsub.f32 %v1359, %v1566
        %1568 = vmatmul.f32.gmra.mxu0 %v1567
        %v1569 = vpop.f32.mrf.mxu0
        %v1570 = vadd.f32 %v1516, %v1569
        %1571 = vdwg.mxu0
        %v1572 = vand.u32 %v1375, 4294901760
        %1573 = vmatpush.msra.mxu0 %v1572
        %v1574 = vand.u32 %v1374, 4294901760
        %1575 = vmatpush.msra.mxu0 %v1574
        %v1576 = vand.u32 %v1373, 4294901760
        %1577 = vmatpush.msra.mxu0 %v1576
        %v1578 = vand.u32 %v1372, 4294901760
        %1579 = vmatpush.msra.mxu0 %v1578
        %v1580 = vand.u32 %v1371, 4294901760
        %1581 = vmatpush.msra.mxu0 %v1580
        %v1582 = vand.u32 %v1370, 4294901760
        %1583 = vmatpush.msra.mxu0 %v1582
        %v1584 = vand.u32 %v1369, 4294901760
        %1585 = vmatpush.msra.mxu0 %v1584
        %v1586 = vand.u32 %v1368, 4294901760
        %1587 = vmatpush.msra.mxu0 %v1586
        %v1588 = vand.u32 %v1367, 4294901760
        %1589 = vmatpush.msra.mxu0 %v1588
        %v1590 = vand.u32 %v1366, 4294901760
        %1591 = vmatpush.msra.mxu0 %v1590
        %v1592 = vand.u32 %v1365, 4294901760
        %1593 = vmatpush.msra.mxu0 %v1592
        %v1594 = vand.u32 %v1364, 4294901760
        %1595 = vmatpush.msra.mxu0 %v1594
        %v1596 = vand.u32 %v1363, 4294901760
        %1597 = vmatpush.msra.mxu0 %v1596
        %v1598 = vand.u32 %v1362, 4294901760
        %1599 = vmatpush.msra.mxu0 %v1598
        %v1600 = vand.u32 %v1361, 4294901760
        %1601 = vmatpush.msra.mxu0 %v1600
        %v1602 = vand.u32 %v1360, 4294901760
        %1603 = vmatpush.msra.mxu0 %v1602
        %v1604 = vand.u32 %v1359, 4294901760
        %v1605 = vsub.f32 %v1359, %v1604
        %v1606 = vand.u32 %v1605, 4294901760
        %1607 = vmatmul.f32.gmra.mxu0 %v1606
        %v1608 = vpop.f32.mrf.mxu0
        %v1609 = vadd.f32 %v1570, %v1608
        %1610 = vdwg.mxu0
        %v1611 = vand.u32 %v1375, 4294901760
        %v1612 = vsub.f32 %v1375, %v1611
        %v1613 = vand.u32 %v1612, 4294901760
        %1614 = vmatpush.msra.mxu0 %v1613
        %v1615 = vand.u32 %v1374, 4294901760
        %v1616 = vsub.f32 %v1374, %v1615
        %v1617 = vand.u32 %v1616, 4294901760
        %1618 = vmatpush.msra.mxu0 %v1617
        %v1619 = vand.u32 %v1373, 4294901760
        %v1620 = vsub.f32 %v1373, %v1619
        %v1621 = vand.u32 %v1620, 4294901760
        %1622 = vmatpush.msra.mxu0 %v1621
        %v1623 = vand.u32 %v1372, 4294901760
        %v1624 = vsub.f32 %v1372, %v1623
        %v1625 = vand.u32 %v1624, 4294901760
        %1626 = vmatpush.msra.mxu0 %v1625
        %v1627 = vand.u32 %v1371, 4294901760
        %v1628 = vsub.f32 %v1371, %v1627
        %v1629 = vand.u32 %v1628, 4294901760
        %1630 = vmatpush.msra.mxu0 %v1629
        %v1631 = vand.u32 %v1370, 4294901760
        %v1632 = vsub.f32 %v1370, %v1631
        %v1633 = vand.u32 %v1632, 4294901760
        %1634 = vmatpush.msra.mxu0 %v1633
        %v1635 = vand.u32 %v1369, 4294901760
        %v1636 = vsub.f32 %v1369, %v1635
        %v1637 = vand.u32 %v1636, 4294901760
        %1638 = vmatpush.msra.mxu0 %v1637
        %v1639 = vand.u32 %v1368, 4294901760
        %v1640 = vsub.f32 %v1368, %v1639
        %v1641 = vand.u32 %v1640, 4294901760
        %1642 = vmatpush.msra.mxu0 %v1641
        %v1643 = vand.u32 %v1367, 4294901760
        %v1644 = vsub.f32 %v1367, %v1643
        %v1645 = vand.u32 %v1644, 4294901760
        %1646 = vmatpush.msra.mxu0 %v1645
        %v1647 = vand.u32 %v1366, 4294901760
        %v1648 = vsub.f32 %v1366, %v1647
        %v1649 = vand.u32 %v1648, 4294901760
        %1650 = vmatpush.msra.mxu0 %v1649
        %v1651 = vand.u32 %v1365, 4294901760
        %v1652 = vsub.f32 %v1365, %v1651
        %v1653 = vand.u32 %v1652, 4294901760
        %1654 = vmatpush.msra.mxu0 %v1653
        %v1655 = vand.u32 %v1364, 4294901760
        %v1656 = vsub.f32 %v1364, %v1655
        %v1657 = vand.u32 %v1656, 4294901760
        %1658 = vmatpush.msra.mxu0 %v1657
        %v1659 = vand.u32 %v1363, 4294901760
        %v1660 = vsub.f32 %v1363, %v1659
        %v1661 = vand.u32 %v1660, 4294901760
        %1662 = vmatpush.msra.mxu0 %v1661
        %v1663 = vand.u32 %v1362, 4294901760
        %v1664 = vsub.f32 %v1362, %v1663
        %v1665 = vand.u32 %v1664, 4294901760
        %1666 = vmatpush.msra.mxu0 %v1665
        %v1667 = vand.u32 %v1361, 4294901760
        %v1668 = vsub.f32 %v1361, %v1667
        %v1669 = vand.u32 %v1668, 4294901760
        %1670 = vmatpush.msra.mxu0 %v1669
        %v1671 = vand.u32 %v1360, 4294901760
        %v1672 = vsub.f32 %v1360, %v1671
        %v1673 = vand.u32 %v1672, 4294901760
        %1674 = vmatpush.msra.mxu0 %v1673
        %v1675 = vand.u32 %v1359, 4294901760
        %1676 = vmatmul.f32.gmra.mxu0 %v1675
        %v1677 = vpop.f32.mrf.mxu0
        %v1678 = vadd.f32 %v1609, %v1677
        %1679 = vdwg.mxu0
        %v1680 = vand.u32 %v1375, 4294901760
        %1681 = vmatpush.msra.mxu0 %v1680
        %v1682 = vand.u32 %v1374, 4294901760
        %1683 = vmatpush.msra.mxu0 %v1682
        %v1684 = vand.u32 %v1373, 4294901760
        %1685 = vmatpush.msra.mxu0 %v1684
        %v1686 = vand.u32 %v1372, 4294901760
        %1687 = vmatpush.msra.mxu0 %v1686
        %v1688 = vand.u32 %v1371, 4294901760
        %1689 = vmatpush.msra.mxu0 %v1688
        %v1690 = vand.u32 %v1370, 4294901760
        %1691 = vmatpush.msra.mxu0 %v1690
        %v1692 = vand.u32 %v1369, 4294901760
        %1693 = vmatpush.msra.mxu0 %v1692
        %v1694 = vand.u32 %v1368, 4294901760
        %1695 = vmatpush.msra.mxu0 %v1694
        %v1696 = vand.u32 %v1367, 4294901760
        %1697 = vmatpush.msra.mxu0 %v1696
        %v1698 = vand.u32 %v1366, 4294901760
        %1699 = vmatpush.msra.mxu0 %v1698
        %v1700 = vand.u32 %v1365, 4294901760
        %1701 = vmatpush.msra.mxu0 %v1700
        %v1702 = vand.u32 %v1364, 4294901760
        %1703 = vmatpush.msra.mxu0 %v1702
        %v1704 = vand.u32 %v1363, 4294901760
        %1705 = vmatpush.msra.mxu0 %v1704
        %v1706 = vand.u32 %v1362, 4294901760
        %1707 = vmatpush.msra.mxu0 %v1706
        %v1708 = vand.u32 %v1361, 4294901760
        %1709 = vmatpush.msra.mxu0 %v1708
        %v1710 = vand.u32 %v1360, 4294901760
        %1711 = vmatpush.msra.mxu0 %v1710
        %v1712 = vand.u32 %v1359, 4294901760
        %1713 = vmatmul.f32.gmra.mxu0 %v1712
        %v1714 = vpop.f32.mrf.mxu0
        %v1715 = vadd.f32 %v1678, %v1714
        %1716 = vdwg.mxu0
        %v1717 = vmax.f32 %v1715, 0.0
        %v1718 = vld [vmem:[%s282] sm:$0xff]
        %vm1719 = vcmask 261120
        %1720 = vst.msk [vmem:[%s329] sm:$0xff] %vm1719, %v1718
        %1722 = vrot.lane.b32.xlu0 %v1717, 32
        %v1723 = vpop.permute.xlu0 %1722
        %vm1725 = vcmask 1047808
        %1726 = vst.msk [vmem:[%s329] sm:$0xff] %vm1725, %v1723
        %1727 = vst.msk [vmem:[%s329 + $0x8] sm:$0xff] %vm1719, %v1723
        %s1728 = sand.u32 %s149, 1
        %s1729 = scalar_lea.sflag [#allocation4], %s1728
        %s1730 = sand.u32 %s149, 1
        %s1731 = smul.addr %s1730, 16
        %s1732 = scalar_lea.vmem [#allocation11], %s1731
        // Predicated region
        $region61: #{tpu_custom_call.1} parent=39 // pred_check
          %p1733 = pneg %p159
        $region62: #{tpu_custom_call.1} parent=39 // pred_check_branch
          %1735 = sbr.rel (%p1733) target = $region64
        $region63: #{tpu_custom_call.1} parent=39 // pred_region
          %1737 = vsyncadd %s1729, 0
          %s1738 = smul.addr %s26, 2
          %s1739 = smul.addr %s1738, 8
          %s1740 = scalar_lea.hbm %s5, %s1739
          %s1742 = sshll.u32 %s1732, 4
          %s1743 = int_to_ptr.vmem [resolvable:$true] %s1742
          %s1744 = sshll.u32 %s1740, 4
          %s1745 = int_to_ptr.hbm [resolvable:$true] %s1744
          %1747 = dma.vmem_to_hbm [thread:$0]  %s1743, 256, %s1745, %s1729
        $region64: #{tpu_custom_call.1} parent=39 // pred_fallthru
          _
      $region40: #{tpu_custom_call.1} parent=5 // pred_fallthru
        _
      %p1748 = scmp.le.s32.totalorder 2, %s21
      // Predicated region
      $region65: #{tpu_custom_call.1} parent=5 // pred_check
        %p1749 = pneg %p1748
      $region66: #{tpu_custom_call.1} parent=5 // pred_check_branch
        %1751 = sbr.rel (%p1749) target = $region68
      $region67: #{tpu_custom_call.1} parent=5 // pred_region
        %s1752 = ssub.s32 %s21, 2
        // Predicated region
        $region69: #{tpu_custom_call.1} parent=67 // pred_check
          %p1753 = pneg %p165
        $region70: #{tpu_custom_call.1} parent=67 // pred_check_branch
          %1755 = sbr.rel (%p1753) target = $region72
        $region71: #{tpu_custom_call.1} parent=67 // pred_region
          %s1756 = sand.u32 %s150, 1
          %s1757 = scalar_lea.sflag [#allocation4], %s1756
          %s1758 = sand.u32 %s150, 1
          %s1759 = smul.addr %s1758, 16
          %s1760 = scalar_lea.vmem [#allocation11], %s1759
          %1762 = dma.done %s1757, 256
        $region72: #{tpu_custom_call.1} parent=67 // pred_fallthru
          _
      $region68: #{tpu_custom_call.1} parent=5 // pred_fallthru
        _
    $region6: #{tpu_custom_call.1} parent=1 // loop_footer
      %s25 = sadd.s32 1, %s21
    $region7: #{tpu_custom_call.1} parent=1 // loop_footer_branch
      %20 = sbr.rel target = $region3
    $region8: #{tpu_custom_call.1} parent=1 // loop_exit
      _
    %1763 = vsyncpa [#allocation3], 1
    %s1764 = scalar_lea.sflag [#allocation3], 1
    %1765 = vsyncpa %s1764, 1
    %1766 = vsyncpa [#allocation6], 1
    %s1767 = scalar_lea.sflag [#allocation6], 1
    %1768 = vsyncpa %s1767, 1
    %1769 = vsyncpa [#allocation9], 1
    %1770 = vsyncpa [#allocation4], 1
    %s1771 = scalar_lea.sflag [#allocation4], 1
    %1772 = vsyncpa %s1771, 1

</llo_original>
